<compile_context>
chip_gen: v7x
topology: tpu7x:2x2x1
jax: 0.10.0
libtpu: 0.0.40
codegen_flags: <defaults>
</compile_context>

<pallas_src>
import functools
import numpy as np
import jax
import jax.numpy as jnp
from jax.experimental import pallas as pl
from jax.experimental.pallas import tpu as pltpu


# ----------------------------------------------------------------------------
# python-side helpers replicating the PyTorch module's logic
# ----------------------------------------------------------------------------
def generate(l1):
    if len(l1) == 1:
        return []
    v = [[l1[0], i] for i in l1[1:]]
    l1 = l1[1:]
    return v + generate(l1)


def _step_list(data_length, stride):
    if data_length % stride == 0:
        return list(range(0, data_length + stride, stride))
    elif data_length % stride <= 5:
        return list(range(0, data_length - stride, stride)) + [data_length]
    else:
        mod = data_length % stride
        return list(range(0, data_length + stride - mod, stride)) + [data_length]


def _safe(x):
    # numpy_fill: replace nan / inf with 0
    return jnp.where(jnp.isfinite(x), x, jnp.zeros_like(x))


def _round_up(x, m):
    return (x + m - 1) // m * m


def ts_features(data, stride, num, num_rev):
    """data: [N,1,F,W] f32 -> [N,1, 2*P+4*F, T]  (corr,cov,std,zscore,return,decay)."""
    N, C, F, W = data.shape
    steps = _step_list(W, stride)
    T = len(steps) - 1
    num_a = jnp.asarray(num, dtype=jnp.int32)
    rev_a = jnp.asarray(num_rev, dtype=jnp.int32)

    cov_l, sdp_l, std_l, zs_l, ret_l, dec_l = [], [], [], [], [], []
    last_w = steps[-1] - steps[-2]
    for i in range(T):
        s, e = steps[i], steps[i + 1]
        w = e - s
        sub = data[:, :, :, s:e]                     # [N,1,F,w]
        sub1 = data[:, :, num_a, s:e]                # [N,1,P,2,w]
        sub2 = data[:, :, rev_a, s:e]

        m1 = sub1.mean(axis=4, keepdims=True)
        m2 = sub2.mean(axis=4, keepdims=True)
        cov = (((sub1 - m1) * (sub2 - m2)).sum(axis=4, keepdims=True) / (w - 1)
               ).mean(axis=3, keepdims=True)
        cov_l.append(_safe(cov)[..., 0, 0])

        sd1 = jnp.std(sub1, axis=4, ddof=1, keepdims=True)
        sd2 = jnp.std(sub2, axis=4, ddof=1, keepdims=True)
        sdp_l.append(_safe((sd1 * sd2).mean(axis=3, keepdims=True))[..., 0, 0])

        std_l.append(_safe(jnp.std(sub, axis=3, ddof=1)))
        zs_l.append(_safe(sub.mean(axis=3) / jnp.std(sub, axis=3, ddof=1)))
        ret_l.append(_safe(sub[:, :, :, -1] / sub[:, :, :, 0] - 1.0))
        wts = jnp.arange(1, w + 1, dtype=jnp.float32)
        wts = wts / wts.sum()
        dec_l.append(_safe((sub * wts).sum(axis=3)))

    stack = lambda lst: jnp.stack(lst, axis=-1)      # [N,1,*,T]
    cov = stack(cov_l)
    sdp = stack(sdp_l)
    fct = (last_w - 1) / last_w
    corr = _safe(cov / sdp * fct)
    return jnp.concatenate(
        [corr, cov, stack(std_l), stack(zs_l), stack(ret_l), stack(dec_l)],
        axis=2).astype(jnp.float32)


# ----------------------------------------------------------------------------
# Pallas kernel (transposed layout: features on sublanes, batch on lanes)
#   misc_ref : SMEM f32[1]            -> [fc3 bias]
#   x_ref    : (3, 128, TILE_N)       -> three raw conv taps, channel-group tiled
#   cw_ref   : (128, 4*n_groups)      -> BN-folded conv weights/bias, one column
#                                        per (group, tap|bias)
#   w1t_ref  : (n_groups, fc2, 128)   -> folded fc1 weight, bf16, structural 0s
#   b1_ref   : (fc2, 1)   w2_ref: (fc3, fc2)   b2_ref: (fc3, 1)   w3_ref: (fc3, 1)
#   out_ref  : (8, TILE_N)            -> lane-dense result row (x8 sublanes)
# ----------------------------------------------------------------------------
def _alphanet_head_kernel(misc_ref, x_ref, cw_ref, w1t_ref, b1_ref, w2_ref,
                          b2_ref, w3_ref, out_ref, *, n_groups):
    x0 = x_ref[0]                                    # (128, TILE_N)
    x1 = x_ref[1]
    x2 = x_ref[2]

    # Conv2d(1,16,(1,3)) + ReLU, 4 channels per 128-sublane group, accumulated
    # straight into fc1 with one MXU dot per group (only one chunk live).
    acc = None
    for g in range(n_groups):
        a0 = cw_ref[:, 4 * g + 0:4 * g + 1]          # (128, 1)
        a1 = cw_ref[:, 4 * g + 1:4 * g + 2]
        a2 = cw_ref[:, 4 * g + 2:4 * g + 3]
        bb = cw_ref[:, 4 * g + 3:4 * g + 4]
        h = jnp.maximum(a0 * x0 + a1 * x1 + a2 * x2 + bb, 0.0)   # (128, TILE_N)
        part = jnp.dot(w1t_ref[g], h.astype(jnp.bfloat16),
                       preferred_element_type=jnp.float32)        # (fc2, TILE_N)
        acc = part if acc is None else acc + part

    # fc1 bias + ReLU
    h1 = jnp.maximum(acc + b1_ref[...], 0.0)                      # (fc2, TILE_N)

    # fc2 on the MXU + sigmoid (dropout = identity)
    h2 = jax.nn.sigmoid(
        jnp.dot(w2_ref[...], h1, preferred_element_type=jnp.float32)
        + b2_ref[...])                                            # (fc3, TILE_N)

    # fc3 as a cheap sublane reduce -> lane-dense (1, TILE_N) row
    out_row = jnp.sum(h2 * w3_ref[...], axis=0, keepdims=True) + misc_ref[0]
    out_ref[...] = jnp.broadcast_to(out_row, out_ref.shape)


# ----------------------------------------------------------------------------
# Wrapper: ts_* feature glue + hoisted/folded BN + packed weights + pallas_call
# ----------------------------------------------------------------------------
def alphanet_forward(data, params, num, num_rev, stride=10, tile_n=512):
    N = data.shape[0]
    data_conv = ts_features(data, stride, num, num_rev)   # [N,1,R,T]
    _, _, R, T = data_conv.shape
    T_out = T - 2
    assert T_out >= 1
    conv_out = params["conv_w"].shape[0]                   # 16
    cpc = R * T_out                                        # cols per conv channel
    assert cpc <= 128, "conv-channel footprint must fit one 128-sublane group"
    cpg = max(1, 128 // cpc)                               # channels per group
    n_groups = -(-conv_out // cpg)

    x3 = data_conv[:, 0]                                   # [N, R, T]

    # Hoisted train-mode BatchNorm2d(1) batch statistics (whole batch, biased var).
    mean = jnp.mean(x3)
    var = jnp.mean((x3 - mean) ** 2)
    inv_std = jax.lax.rsqrt(var + 1e-5)
    scale = params["bn_gamma"] * inv_std
    shift = params["bn_beta"] - mean * scale

    # Fold BN into the conv:
    #   conv(xn)[o] = sum_k scale*w[o,k]*x_k + (shift*sum_k w[o,k] + b[o])
    A = scale * params["conv_w"]                                       # (16,3)
    C = shift * jnp.sum(params["conv_w"], axis=1) + params["conv_b"]   # (16,)

    # Per-row conv weight columns: row p in a group maps to channel g*cpg + p//cpc.
    row_chan = np.minimum(np.arange(128) // cpc, cpg - 1)
    row_valid = np.arange(128) < cpg * cpc
    cw_cols = []
    for g in range(n_groups):
        gch = g * cpg + row_chan
        mask = jnp.asarray((row_valid & (gch < conv_out)).astype(np.float32))
        gch = np.minimum(gch, conv_out - 1)
        for k in range(3):
            cw_cols.append(A[gch, k] * mask)
        cw_cols.append(C[gch] * mask)
    cw = jnp.stack(cw_cols, axis=1).astype(jnp.float32)    # (128, 4*n_groups)

    # fc1 weight folded to the packed/transposed layout, bf16 (zeros stay exact).
    w1 = np.asarray(params["w1"], np.float32)              # (fc2, conv_out*cpc)
    fc2n = w1.shape[0]
    assert w1.shape[1] == conv_out * cpc, "fc1_neuron must equal 16*R*T_out"
    w1t_np = np.zeros((n_groups, fc2n, 128), np.float32)
    for g in range(n_groups):
        for c in range(cpg):
            o = g * cpg + c
            if o >= conv_out:
                break
            w1t_np[g, :, c * cpc:(c + 1) * cpc] = w1[:, o * cpc:(o + 1) * cpc]
    w1t = jnp.asarray(w1t_np, jnp.bfloat16)

    b1 = params["b1"].reshape(-1, 1).astype(jnp.float32)   # (fc2, 1)
    w2 = params["w2"].astype(jnp.float32)                  # (fc3, fc2)
    b2 = params["b2"].reshape(-1, 1).astype(jnp.float32)   # (fc3, 1)
    w3 = params["w3"].reshape(-1, 1).astype(jnp.float32)   # (fc3, 1)
    fc3n = w2.shape[0]
    misc = params["b3"].reshape(-1).astype(jnp.float32)    # (1,)  fc3 bias

    # Batch tiling on the lane axis (tile multiple of 128; even step counts for
    # large N keep v7x's two TensorCores balanced).
    tile_n = _round_up(max(tile_n, 128), 128)
    tile = min(tile_n, _round_up(max(N, 1), 128))
    n_pad = _round_up(N, tile)

    # Kernel input: three raw conv taps, tiled cpg x per channel-group on the
    # sublane axis, batch on the lane axis (single layout-build, no extra pass).
    taps = [x3[:, :, k:k + T_out].reshape(N, cpc) for k in range(3)]
    taps = [jnp.pad(jnp.tile(t, (1, cpg)),
                    ((0, n_pad - N), (0, 128 - cpg * cpc))) for t in taps]
    x_t = jnp.transpose(jnp.stack(taps, axis=0), (0, 2, 1))  # (3, 128, n_pad)

    ce = pl.CostEstimate(
        flops=int(2 * n_pad * (n_groups * 128) * fc2n          # fc1 dots
                  + 7 * n_pad * (n_groups * 128)               # conv madds + relu
                  + 2 * n_pad * fc2n * fc3n + 3 * n_pad * fc3n),
        transcendentals=int(n_pad * fc3n),
        bytes_accessed=int(4 * 3 * 128 * n_pad + 2 * w1t.size + 4 * 8 * n_pad),
    )

    kernel = functools.partial(_alphanet_head_kernel, n_groups=n_groups)

    out = pl.pallas_call(
        kernel,
        out_shape=jax.ShapeDtypeStruct((8, n_pad), jnp.float32),
        grid=(n_pad // tile,),
        in_specs=[
            pl.BlockSpec(memory_space=pltpu.MemorySpace.SMEM),     # misc (b3)
            pl.BlockSpec((3, 128, tile), lambda i: (0, 0, i)),     # conv taps
            pl.BlockSpec(cw.shape, lambda i: (0, 0)),              # conv weights
            pl.BlockSpec(w1t.shape, lambda i: (0, 0, 0)),          # fc1 weights
            pl.BlockSpec(b1.shape, lambda i: (0, 0)),
            pl.BlockSpec(w2.shape, lambda i: (0, 0)),
            pl.BlockSpec(b2.shape, lambda i: (0, 0)),
            pl.BlockSpec(w3.shape, lambda i: (0, 0)),
        ],
        out_specs=pl.BlockSpec((8, tile), lambda i: (0, i)),
        compiler_params=pltpu.CompilerParams(dimension_semantics=("parallel",)),
        cost_estimate=ce,
    )(misc, x_t, cw, w1t, b1, w2, b2, w3)

    # output = fc3(...).T[0]  -> [N]
    return out[0, :N]


# ----------------------------------------------------------------------------
# Plain-JAX reference of the same forward math (independent formulation)
# ----------------------------------------------------------------------------
def alphanet_reference(data, params, num, num_rev, stride=10):
    data_conv = ts_features(data, stride, num, num_rev)   # [N,1,R,T]
    N, _, R, T = data_conv.shape
    T_out = T - 2
    x = data_conv[:, 0]                                    # [N,R,T]
    mean = jnp.mean(x)
    var = jnp.mean((x - mean) ** 2)
    xn = (x - mean) / jnp.sqrt(var + 1e-5) * params["bn_gamma"] + params["bn_beta"]
    wc, bc = params["conv_w"], params["conv_b"]
    conv = (wc[None, :, 0, None, None] * xn[:, None, :, 0:T_out]
            + wc[None, :, 1, None, None] * xn[:, None, :, 1:T_out + 1]
            + wc[None, :, 2, None, None] * xn[:, None, :, 2:T_out + 2]
            + bc[None, :, None, None])                      # [N,16,R,T_out]
    h = jnp.maximum(conv, 0.0).reshape(N, -1)
    h1 = jnp.maximum(h @ params["w1"].T + params["b1"], 0.0)
    h2 = jax.nn.sigmoid(h1 @ params["w2"].T + params["b2"])
    return (h2 @ params["w3"].T + params["b3"])[:, 0]


if __name__ == "__main__":
    feat_nums = 4                        # F
    W, stride = 30, 10
    num = generate(list(range(feat_nums)))
    num_rev = [list(reversed(l)) for l in num]
    P = len(num)                         # C(F,2) = 6
    T = len(_step_list(W, stride)) - 1   # 3
    R = 2 * P + 4 * feat_nums            # 28
    T_out = T - 2                        # 1
    fc1_neuron = 16 * R * T_out          # 448
    fc2_neuron, fc3_neuron, fcast_neuron = 32, 16, 1

    key = jax.random.PRNGKey(0)
    keys = jax.random.split(key, 12)
    params = {
        "bn_gamma": jnp.asarray(1.0, jnp.float32),
        "bn_beta": jnp.asarray(0.0, jnp.float32),
        "conv_w": 0.1 * jax.random.normal(keys[1], (16, 3), jnp.float32),
        "conv_b": 0.1 * jax.random.normal(keys[2], (16,), jnp.float32),
        "w1": 0.1 * jax.random.normal(keys[3], (fc2_neuron, fc1_neuron), jnp.float32),
        "b1": 0.1 * jax.random.normal(keys[4], (fc2_neuron,), jnp.float32),
        "w2": 0.1 * jax.random.normal(keys[5], (fc3_neuron, fc2_neuron), jnp.float32),
        "b2": 0.1 * jax.random.normal(keys[6], (fc3_neuron,), jnp.float32),
        "w3": 0.1 * jax.random.normal(keys[7], (fcast_neuron, fc3_neuron), jnp.float32),
        "b3": 0.1 * jax.random.normal(keys[8], (fcast_neuron,), jnp.float32),
    }

    # Small batch (single 128-lane tile) and a larger batch exercising the
    # batch grid (2 even grid steps of 512 lanes) with the hoisted BN stats.
    for idx, N in enumerate((2, 513)):
        data = jax.random.normal(keys[9 + idx], (N, 1, feat_nums, W), jnp.float32)
        out = alphanet_forward(data, params, num, num_rev, stride=stride)
        out = jax.block_until_ready(out)
        assert out.shape == (N,)
        assert bool(jnp.all(jnp.isfinite(out)))
        ref = alphanet_reference(data, params, num, num_rev, stride=stride)
        np.testing.assert_allclose(np.asarray(out), np.asarray(ref),
                                   rtol=1e-2, atol=1e-2)

    print("KERNEL_OK")
</pallas_src>

<mosaic_0001>
module attributes {stable_mosaic.version = 11 : i64} {
  func.func @_alphanet_head_kernel(%arg0: i32, %arg1: memref<1xf32, #tpu.memory_space<smem>>, %arg2: memref<3x128x128xf32, #tpu.memory_space<vmem>>, %arg3: memref<128x16xf32, #tpu.memory_space<vmem>>, %arg4: memref<4x32x128xbf16, #tpu.memory_space<vmem>>, %arg5: memref<32x1xf32, #tpu.memory_space<vmem>>, %arg6: memref<16x32xf32, #tpu.memory_space<vmem>>, %arg7: memref<16x1xf32, #tpu.memory_space<vmem>>, %arg8: memref<16x1xf32, #tpu.memory_space<vmem>>, %arg9: memref<8x128xf32, #tpu.memory_space<vmem>>) attributes {dimension_semantics = [#tpu.dimension_semantics<parallel>], iteration_bounds = array<i64: 1>, scalar_prefetch = 0 : i64, scratch_operands = 0 : i64, tpu.core_type = #tpu.core_type<tc>, window_params = [{transform_indices = @transform_0, window_bounds = array<i64: 1>}, {transform_indices = @transform_1, window_bounds = array<i64: 3, 128, 128>}, {pipeline_mode = #tpu.pipeline_mode<synchronous>, transform_indices = @transform_2, window_bounds = array<i64: 128, 16>}, {pipeline_mode = #tpu.pipeline_mode<synchronous>, transform_indices = @transform_3, window_bounds = array<i64: 4, 32, 128>}, {pipeline_mode = #tpu.pipeline_mode<synchronous>, transform_indices = @transform_4, window_bounds = array<i64: 32, 1>}, {pipeline_mode = #tpu.pipeline_mode<synchronous>, transform_indices = @transform_5, window_bounds = array<i64: 16, 32>}, {pipeline_mode = #tpu.pipeline_mode<synchronous>, transform_indices = @transform_6, window_bounds = array<i64: 16, 1>}, {pipeline_mode = #tpu.pipeline_mode<synchronous>, transform_indices = @transform_7, window_bounds = array<i64: 16, 1>}, {transform_indices = @transform_8, window_bounds = array<i64: 8, 128>}]} {
    %c0 = arith.constant 0 : index
    %c0_0 = arith.constant 0 : index
    %c0_1 = arith.constant 0 : index
    %0 = vector.load %arg2[%c0, %c0_0, %c0_1] : memref<3x128x128xf32, #tpu.memory_space<vmem>>, vector<1x128x128xf32>
    %1 = vector.shape_cast %0 : vector<1x128x128xf32> to vector<128x128xf32>
    %c1 = arith.constant 1 : index
    %c0_2 = arith.constant 0 : index
    %c0_3 = arith.constant 0 : index
    %2 = vector.load %arg2[%c1, %c0_2, %c0_3] : memref<3x128x128xf32, #tpu.memory_space<vmem>>, vector<1x128x128xf32>
    %3 = vector.shape_cast %2 : vector<1x128x128xf32> to vector<128x128xf32>
    %c2 = arith.constant 2 : index
    %c0_4 = arith.constant 0 : index
    %c0_5 = arith.constant 0 : index
    %4 = vector.load %arg2[%c2, %c0_4, %c0_5] : memref<3x128x128xf32, #tpu.memory_space<vmem>>, vector<1x128x128xf32>
    %5 = vector.shape_cast %4 : vector<1x128x128xf32> to vector<128x128xf32>
    %c0_6 = arith.constant 0 : index
    %c0_7 = arith.constant 0 : index
    %6 = vector.load %arg3[%c0_6, %c0_7] : memref<128x16xf32, #tpu.memory_space<vmem>>, vector<128x1xf32>
    %c0_8 = arith.constant 0 : index
    %c1_9 = arith.constant 1 : index
    %7 = vector.load %arg3[%c0_8, %c1_9] : memref<128x16xf32, #tpu.memory_space<vmem>>, vector<128x1xf32>
    %c0_10 = arith.constant 0 : index
    %c2_11 = arith.constant 2 : index
    %8 = vector.load %arg3[%c0_10, %c2_11] : memref<128x16xf32, #tpu.memory_space<vmem>>, vector<128x1xf32>
    %c0_12 = arith.constant 0 : index
    %c3 = arith.constant 3 : index
    %9 = vector.load %arg3[%c0_12, %c3] : memref<128x16xf32, #tpu.memory_space<vmem>>, vector<128x1xf32>
    %10 = vector.broadcast %6 : vector<128x1xf32> to vector<128x128xf32>
    %11 = arith.mulf %10, %1 : vector<128x128xf32>
    %12 = vector.broadcast %7 : vector<128x1xf32> to vector<128x128xf32>
    %13 = arith.mulf %12, %3 : vector<128x128xf32>
    %14 = arith.addf %11, %13 : vector<128x128xf32>
    %15 = vector.broadcast %8 : vector<128x1xf32> to vector<128x128xf32>
    %16 = arith.mulf %15, %5 : vector<128x128xf32>
    %17 = arith.addf %14, %16 : vector<128x128xf32>
    %18 = vector.broadcast %9 : vector<128x1xf32> to vector<128x128xf32>
    %19 = arith.addf %17, %18 : vector<128x128xf32>
    %cst = arith.constant 0.000000e+00 : f32
    %20 = vector.broadcast %cst : f32 to vector<128x128xf32>
    %21 = arith.maximumf %19, %20 : vector<128x128xf32>
    %c0_13 = arith.constant 0 : index
    %c0_14 = arith.constant 0 : index
    %c0_15 = arith.constant 0 : index
    %22 = vector.load %arg4[%c0_13, %c0_14, %c0_15] : memref<4x32x128xbf16, #tpu.memory_space<vmem>>, vector<1x32x128xbf16>
    %23 = vector.shape_cast %22 : vector<1x32x128xbf16> to vector<32x128xbf16>
    %24 = arith.truncf %21 : vector<128x128xf32> to vector<128x128xbf16>
    %cst_16 = arith.constant dense<0.000000e+00> : vector<32x128xf32>
    %25 = tpu.matmul %23, %24, %cst_16 {dimension_numbers = #tpu.dot_dimension_numbers<[1], [0], [0], [1], [0, 0, 1, 1], [], []>} : vector<32x128xbf16>, vector<128x128xbf16>, vector<32x128xf32> -> vector<32x128xf32>
    %c0_17 = arith.constant 0 : index
    %c4 = arith.constant 4 : index
    %26 = vector.load %arg3[%c0_17, %c4] : memref<128x16xf32, #tpu.memory_space<vmem>>, vector<128x1xf32>
    %c0_18 = arith.constant 0 : index
    %c5 = arith.constant 5 : index
    %27 = vector.load %arg3[%c0_18, %c5] : memref<128x16xf32, #tpu.memory_space<vmem>>, vector<128x1xf32>
    %c0_19 = arith.constant 0 : index
    %c6 = arith.constant 6 : index
    %28 = vector.load %arg3[%c0_19, %c6] : memref<128x16xf32, #tpu.memory_space<vmem>>, vector<128x1xf32>
    %c0_20 = arith.constant 0 : index
    %c7 = arith.constant 7 : index
    %29 = vector.load %arg3[%c0_20, %c7] : memref<128x16xf32, #tpu.memory_space<vmem>>, vector<128x1xf32>
    %30 = vector.broadcast %26 : vector<128x1xf32> to vector<128x128xf32>
    %31 = arith.mulf %30, %1 : vector<128x128xf32>
    %32 = vector.broadcast %27 : vector<128x1xf32> to vector<128x128xf32>
    %33 = arith.mulf %32, %3 : vector<128x128xf32>
    %34 = arith.addf %31, %33 : vector<128x128xf32>
    %35 = vector.broadcast %28 : vector<128x1xf32> to vector<128x128xf32>
    %36 = arith.mulf %35, %5 : vector<128x128xf32>
    %37 = arith.addf %34, %36 : vector<128x128xf32>
    %38 = vector.broadcast %29 : vector<128x1xf32> to vector<128x128xf32>
    %39 = arith.addf %37, %38 : vector<128x128xf32>
    %cst_21 = arith.constant 0.000000e+00 : f32
    %40 = vector.broadcast %cst_21 : f32 to vector<128x128xf32>
    %41 = arith.maximumf %39, %40 : vector<128x128xf32>
    %c1_22 = arith.constant 1 : index
    %c0_23 = arith.constant 0 : index
    %c0_24 = arith.constant 0 : index
    %42 = vector.load %arg4[%c1_22, %c0_23, %c0_24] : memref<4x32x128xbf16, #tpu.memory_space<vmem>>, vector<1x32x128xbf16>
    %43 = vector.shape_cast %42 : vector<1x32x128xbf16> to vector<32x128xbf16>
    %44 = arith.truncf %41 : vector<128x128xf32> to vector<128x128xbf16>
    %cst_25 = arith.constant dense<0.000000e+00> : vector<32x128xf32>
    %45 = tpu.matmul %43, %44, %cst_25 {dimension_numbers = #tpu.dot_dimension_numbers<[1], [0], [0], [1], [0, 0, 1, 1], [], []>} : vector<32x128xbf16>, vector<128x128xbf16>, vector<32x128xf32> -> vector<32x128xf32>
    %46 = arith.addf %25, %45 : vector<32x128xf32>
    %c0_26 = arith.constant 0 : index
    %c8 = arith.constant 8 : index
    %47 = vector.load %arg3[%c0_26, %c8] : memref<128x16xf32, #tpu.memory_space<vmem>>, vector<128x1xf32>
    %c0_27 = arith.constant 0 : index
    %c9 = arith.constant 9 : index
    %48 = vector.load %arg3[%c0_27, %c9] : memref<128x16xf32, #tpu.memory_space<vmem>>, vector<128x1xf32>
    %c0_28 = arith.constant 0 : index
    %c10 = arith.constant 10 : index
    %49 = vector.load %arg3[%c0_28, %c10] : memref<128x16xf32, #tpu.memory_space<vmem>>, vector<128x1xf32>
    %c0_29 = arith.constant 0 : index
    %c11 = arith.constant 11 : index
    %50 = vector.load %arg3[%c0_29, %c11] : memref<128x16xf32, #tpu.memory_space<vmem>>, vector<128x1xf32>
    %51 = vector.broadcast %47 : vector<128x1xf32> to vector<128x128xf32>
    %52 = arith.mulf %51, %1 : vector<128x128xf32>
    %53 = vector.broadcast %48 : vector<128x1xf32> to vector<128x128xf32>
    %54 = arith.mulf %53, %3 : vector<128x128xf32>
    %55 = arith.addf %52, %54 : vector<128x128xf32>
    %56 = vector.broadcast %49 : vector<128x1xf32> to vector<128x128xf32>
    %57 = arith.mulf %56, %5 : vector<128x128xf32>
    %58 = arith.addf %55, %57 : vector<128x128xf32>
    %59 = vector.broadcast %50 : vector<128x1xf32> to vector<128x128xf32>
    %60 = arith.addf %58, %59 : vector<128x128xf32>
    %cst_30 = arith.constant 0.000000e+00 : f32
    %61 = vector.broadcast %cst_30 : f32 to vector<128x128xf32>
    %62 = arith.maximumf %60, %61 : vector<128x128xf32>
    %c2_31 = arith.constant 2 : index
    %c0_32 = arith.constant 0 : index
    %c0_33 = arith.constant 0 : index
    %63 = vector.load %arg4[%c2_31, %c0_32, %c0_33] : memref<4x32x128xbf16, #tpu.memory_space<vmem>>, vector<1x32x128xbf16>
    %64 = vector.shape_cast %63 : vector<1x32x128xbf16> to vector<32x128xbf16>
    %65 = arith.truncf %62 : vector<128x128xf32> to vector<128x128xbf16>
    %cst_34 = arith.constant dense<0.000000e+00> : vector<32x128xf32>
    %66 = tpu.matmul %64, %65, %cst_34 {dimension_numbers = #tpu.dot_dimension_numbers<[1], [0], [0], [1], [0, 0, 1, 1], [], []>} : vector<32x128xbf16>, vector<128x128xbf16>, vector<32x128xf32> -> vector<32x128xf32>
    %67 = arith.addf %46, %66 : vector<32x128xf32>
    %c0_35 = arith.constant 0 : index
    %c12 = arith.constant 12 : index
    %68 = vector.load %arg3[%c0_35, %c12] : memref<128x16xf32, #tpu.memory_space<vmem>>, vector<128x1xf32>
    %c0_36 = arith.constant 0 : index
    %c13 = arith.constant 13 : index
    %69 = vector.load %arg3[%c0_36, %c13] : memref<128x16xf32, #tpu.memory_space<vmem>>, vector<128x1xf32>
    %c0_37 = arith.constant 0 : index
    %c14 = arith.constant 14 : index
    %70 = vector.load %arg3[%c0_37, %c14] : memref<128x16xf32, #tpu.memory_space<vmem>>, vector<128x1xf32>
    %c0_38 = arith.constant 0 : index
    %c15 = arith.constant 15 : index
    %71 = vector.load %arg3[%c0_38, %c15] : memref<128x16xf32, #tpu.memory_space<vmem>>, vector<128x1xf32>
    %72 = vector.broadcast %68 : vector<128x1xf32> to vector<128x128xf32>
    %73 = arith.mulf %72, %1 : vector<128x128xf32>
    %74 = vector.broadcast %69 : vector<128x1xf32> to vector<128x128xf32>
    %75 = arith.mulf %74, %3 : vector<128x128xf32>
    %76 = arith.addf %73, %75 : vector<128x128xf32>
    %77 = vector.broadcast %70 : vector<128x1xf32> to vector<128x128xf32>
    %78 = arith.mulf %77, %5 : vector<128x128xf32>
    %79 = arith.addf %76, %78 : vector<128x128xf32>
    %80 = vector.broadcast %71 : vector<128x1xf32> to vector<128x128xf32>
    %81 = arith.addf %79, %80 : vector<128x128xf32>
    %cst_39 = arith.constant 0.000000e+00 : f32
    %82 = vector.broadcast %cst_39 : f32 to vector<128x128xf32>
    %83 = arith.maximumf %81, %82 : vector<128x128xf32>
    %c3_40 = arith.constant 3 : index
    %c0_41 = arith.constant 0 : index
    %c0_42 = arith.constant 0 : index
    %84 = vector.load %arg4[%c3_40, %c0_41, %c0_42] : memref<4x32x128xbf16, #tpu.memory_space<vmem>>, vector<1x32x128xbf16>
    %85 = vector.shape_cast %84 : vector<1x32x128xbf16> to vector<32x128xbf16>
    %86 = arith.truncf %83 : vector<128x128xf32> to vector<128x128xbf16>
    %cst_43 = arith.constant dense<0.000000e+00> : vector<32x128xf32>
    %87 = tpu.matmul %85, %86, %cst_43 {dimension_numbers = #tpu.dot_dimension_numbers<[1], [0], [0], [1], [0, 0, 1, 1], [], []>} : vector<32x128xbf16>, vector<128x128xbf16>, vector<32x128xf32> -> vector<32x128xf32>
    %88 = arith.addf %67, %87 : vector<32x128xf32>
    %c0_44 = arith.constant 0 : index
    %c0_45 = arith.constant 0 : index
    %89 = vector.load %arg5[%c0_44, %c0_45] : memref<32x1xf32, #tpu.memory_space<vmem>>, vector<32x1xf32>
    %90 = vector.broadcast %89 : vector<32x1xf32> to vector<32x128xf32>
    %91 = arith.addf %88, %90 : vector<32x128xf32>
    %cst_46 = arith.constant 0.000000e+00 : f32
    %92 = vector.broadcast %cst_46 : f32 to vector<32x128xf32>
    %93 = arith.maximumf %91, %92 : vector<32x128xf32>
    %c0_47 = arith.constant 0 : index
    %c0_48 = arith.constant 0 : index
    %94 = vector.load %arg6[%c0_47, %c0_48] : memref<16x32xf32, #tpu.memory_space<vmem>>, vector<16x32xf32>
    %cst_49 = arith.constant dense<0.000000e+00> : vector<16x128xf32>
    %95 = tpu.matmul %94, %93, %cst_49 {dimension_numbers = #tpu.dot_dimension_numbers<[1], [0], [0], [1], [0, 0, 1, 1], [], []>} : vector<16x32xf32>, vector<32x128xf32>, vector<16x128xf32> -> vector<16x128xf32>
    %c0_50 = arith.constant 0 : index
    %c0_51 = arith.constant 0 : index
    %96 = vector.load %arg7[%c0_50, %c0_51] : memref<16x1xf32, #tpu.memory_space<vmem>>, vector<16x1xf32>
    %97 = vector.broadcast %96 : vector<16x1xf32> to vector<16x128xf32>
    %98 = arith.addf %95, %97 : vector<16x128xf32>
    %99 = arith.negf %98 : vector<16x128xf32>
    %100 = math.exp %99 : vector<16x128xf32>
    %cst_52 = arith.constant 1.000000e+00 : f32
    %101 = vector.broadcast %cst_52 : f32 to vector<16x128xf32>
    %102 = arith.addf %101, %100 : vector<16x128xf32>
    %103 = arith.divf %101, %102 : vector<16x128xf32>
    %c0_53 = arith.constant 0 : index
    %c0_54 = arith.constant 0 : index
    %104 = vector.load %arg8[%c0_53, %c0_54] : memref<16x1xf32, #tpu.memory_space<vmem>>, vector<16x1xf32>
    %105 = vector.broadcast %104 : vector<16x1xf32> to vector<16x128xf32>
    %106 = arith.mulf %103, %105 : vector<16x128xf32>
    %cst_55 = arith.constant dense<0.000000e+00> : vector<128xf32>
    %107 = vector.multi_reduction <add>, %106, %cst_55 [0] : vector<16x128xf32> to vector<128xf32>
    %108 = vector.shape_cast %107 : vector<128xf32> to vector<1x128xf32>
    %c0_56 = arith.constant 0 : index
    %109 = memref.load %arg1[%c0_56] : memref<1xf32, #tpu.memory_space<smem>>
    %110 = vector.broadcast %109 : f32 to vector<1x128xf32>
    %111 = arith.addf %108, %110 : vector<1x128xf32>
    %112 = vector.shape_cast %111 : vector<1x128xf32> to vector<1x128xf32>
    %113 = vector.broadcast %112 : vector<1x128xf32> to vector<8x128xf32>
    %c0_57 = arith.constant 0 : index
    %c0_58 = arith.constant 0 : index
    %114 = vector.load %arg9[%c0_57, %c0_58] : memref<8x128xf32, #tpu.memory_space<vmem>>, vector<8x128xf32>
    tpu.vector_store %arg9[%c0_57, %c0_58], %113 {strides = array<i32>} : memref<8x128xf32, #tpu.memory_space<vmem>>, vector<8x128xf32>,
    return
  }
  func.func @transform_0(%arg0: i32) -> i32 {
    %c0_i32 = arith.constant 0 : i32
    %c0_i32_0 = arith.constant 0 : i32
    return %c0_i32 : i32
  }
  func.func @transform_1(%arg0: i32) -> (i32, i32, i32) {
    %c0_i32 = arith.constant 0 : i32
    %c0_i32_0 = arith.constant 0 : i32
    %c0_i32_1 = arith.constant 0 : i32
    return %c0_i32, %c0_i32_0, %arg0 : i32, i32, i32
  }
  func.func @transform_2(%arg0: i32) -> (i32, i32) {
    %c0_i32 = arith.constant 0 : i32
    %c0_i32_0 = arith.constant 0 : i32
    %c0_i32_1 = arith.constant 0 : i32
    return %c0_i32, %c0_i32_0 : i32, i32
  }
  func.func @transform_3(%arg0: i32) -> (i32, i32, i32) {
    %c0_i32 = arith.constant 0 : i32
    %c0_i32_0 = arith.constant 0 : i32
    %c0_i32_1 = arith.constant 0 : i32
    %c0_i32_2 = arith.constant 0 : i32
    return %c0_i32, %c0_i32_0, %c0_i32_1 : i32, i32, i32
  }
  func.func @transform_4(%arg0: i32) -> (i32, i32) {
    %c0_i32 = arith.constant 0 : i32
    %c0_i32_0 = arith.constant 0 : i32
    %c0_i32_1 = arith.constant 0 : i32
    return %c0_i32, %c0_i32_0 : i32, i32
  }
  func.func @transform_5(%arg0: i32) -> (i32, i32) {
    %c0_i32 = arith.constant 0 : i32
    %c0_i32_0 = arith.constant 0 : i32
    %c0_i32_1 = arith.constant 0 : i32
    return %c0_i32, %c0_i32_0 : i32, i32
  }
  func.func @transform_6(%arg0: i32) -> (i32, i32) {
    %c0_i32 = arith.constant 0 : i32
    %c0_i32_0 = arith.constant 0 : i32
    %c0_i32_1 = arith.constant 0 : i32
    return %c0_i32, %c0_i32_0 : i32, i32
  }
  func.func @transform_7(%arg0: i32) -> (i32, i32) {
    %c0_i32 = arith.constant 0 : i32
    %c0_i32_0 = arith.constant 0 : i32
    %c0_i32_1 = arith.constant 0 : i32
    return %c0_i32, %c0_i32_0 : i32, i32
  }
  func.func @transform_8(%arg0: i32) -> (i32, i32) {
    %c0_i32 = arith.constant 0 : i32
    %c0_i32_0 = arith.constant 0 : i32
    return %c0_i32, %arg0 : i32, i32
  }
}

</mosaic_0001>

<llo_original>
// kernel: tpu_custom_call.1
$region0: #{tpu_custom_call.1}
  #allocation0 [shape = 'u32[]', space=smem, size = 0x4, offset = 0x4, fixed_abs, tag = 'smem constant byte address 0x4 - core index']
  #allocation1 [shape = 'u32[144,128]{1,0:T(1,128)}', space=vmem, size = 0x12000, scoped, tag = 'internal scratch']
  #allocation2 [shape = 'f32[1]{0:T(128)S(6)}', space=smem, size = 0x200, scoped, tag = 'scoped memory for tpu_custom_call.1']
  %s0 = inlined_call_operand.<no memory space> [shape: f32[1], index: 0, kind: input, shape index: {}]
  %s1 = inlined_call_operand.hbm [shape: f32[3,128,128], index: 1, kind: input, shape index: {}]
  %s2 = inlined_call_operand.vmem [shape: f32[128,16], index: 2, kind: input, shape index: {}]
  %s3 = inlined_call_operand.vmem [shape: bf16[4,32,128], index: 3, kind: input, shape index: {}]
  %s4 = inlined_call_operand.vmem [shape: f32[32,1], index: 4, kind: input, shape index: {}]
  %s5 = inlined_call_operand.vmem [shape: f32[16,32], index: 5, kind: input, shape index: {}]
  %s6 = inlined_call_operand.vmem [shape: f32[16,1], index: 6, kind: input, shape index: {}]
  %s7 = inlined_call_operand.vmem [shape: f32[16,1], index: 7, kind: input, shape index: {}]
  %s8 = inlined_call_operand.hbm [shape: f32[8,128], index: 8, kind: output, shape index: {}]
  %s9 = sld [smem:[#allocation0]]
  $region46: #{tpu_custom_call.1} parent=0
    _
  %s11 = ssub.s32 1, %s9
  %s12 = scalar_select 0, %s11, %s9
  %13 = sst [smem:[#allocation2]] %s0
  $region1: #{tpu_custom_call.1} parent=0
    #allocation3 [shape = 'u8[196608]{0}', space=vmem, size = 0x30000, scoped, tag = 'input window, operand 1, single buffered']
    #allocation4 [shape = 's32[1]{0}', space=sflag, size = 0x4, scoped, tag = 'scoped memory for tpu_custom_call.1']
    #allocation5 [shape = 's32[1]{0}', space=sflag, size = 0x4, scoped, tag = 'scoped memory for tpu_custom_call.1']
    #allocation6 [shape = 'u8[4096]{0}', space=vmem, size = 0x1000, scoped, tag = 'output window, operand 0, single buffered']
    %14 = vsyncpa [#allocation4], 0
    %15 = vsyncpa [#allocation5], 0
    // Predicated region
    $region2: #{tpu_custom_call.1} parent=1 // pred_check
      _
    $region3: #{tpu_custom_call.1} parent=1 // pred_check_branch
      %17 = sbr.rel (0) target = $region5
    $region4: #{tpu_custom_call.1} parent=1 // pred_region
      _
    $region5: #{tpu_custom_call.1} parent=1 // pred_fallthru
      _
    // Predicated region
    $region6: #{tpu_custom_call.1} parent=1 // pred_check
      _
    $region7: #{tpu_custom_call.1} parent=1 // pred_check_branch
      %19 = sbr.rel (0) target = $region9
    $region8: #{tpu_custom_call.1} parent=1 // pred_region
      %s21 = ssub.s32 6144, 6144
      %22 = vsyncadd [#allocation4], %s21
      %s23 = sshll.u32 [#allocation3], 4
      %s24 = int_to_ptr.vmem [resolvable:$true] %s23
      %29 = dma.hbm_to_vmem [thread:$0]  %s1, 6144, %s24, [#allocation4], 128, 128, 8
    $region9: #{tpu_custom_call.1} parent=1 // pred_fallthru
      _
    // Predicated region
    $region10: #{tpu_custom_call.1} parent=1 // pred_check
      _
    $region11: #{tpu_custom_call.1} parent=1 // pred_check_branch
      %31 = sbr.rel (0) target = $region13
    $region12: #{tpu_custom_call.1} parent=1 // pred_region
      _
    $region13: #{tpu_custom_call.1} parent=1 // pred_fallthru
      _
    // Predicated region
    $region14: #{tpu_custom_call.1} parent=1 // pred_check
      _
    $region15: #{tpu_custom_call.1} parent=1 // pred_check_branch
      %33 = sbr.rel (0) target = $region17
    $region16: #{tpu_custom_call.1} parent=1 // pred_region
      _
    $region17: #{tpu_custom_call.1} parent=1 // pred_fallthru
      _
    // Predicated region
    $region18: #{tpu_custom_call.1} parent=1 // pred_check
      _
    $region19: #{tpu_custom_call.1} parent=1 // pred_check_branch
      %35 = sbr.rel (0) target = $region21
    $region20: #{tpu_custom_call.1} parent=1 // pred_region
      _
    $region21: #{tpu_custom_call.1} parent=1 // pred_fallthru
      _
    // Predicated region
    $region22: #{tpu_custom_call.1} parent=1 // pred_check
      _
    $region23: #{tpu_custom_call.1} parent=1 // pred_check_branch
      %37 = sbr.rel (0) target = $region25
    $region24: #{tpu_custom_call.1} parent=1 // pred_region
      _
    $region25: #{tpu_custom_call.1} parent=1 // pred_fallthru
      _
    // Predicated region
    $region26: #{tpu_custom_call.1} parent=1 // pred_check
      _
    $region27: #{tpu_custom_call.1} parent=1 // pred_check_branch
      %39 = sbr.rel (0) target = $region29
    $region28: #{tpu_custom_call.1} parent=1 // pred_region
      _
    $region29: #{tpu_custom_call.1} parent=1 // pred_fallthru
      _
    // Predicated region
    $region30: #{tpu_custom_call.1} parent=1 // pred_check
      _
    $region31: #{tpu_custom_call.1} parent=1 // pred_check_branch
      %41 = sbr.rel (0) target = $region33
    $region32: #{tpu_custom_call.1} parent=1 // pred_region
      _
    $region33: #{tpu_custom_call.1} parent=1 // pred_fallthru
      _
    // Predicated region
    $region34: #{tpu_custom_call.1} parent=1 // pred_check
      _
    $region35: #{tpu_custom_call.1} parent=1 // pred_check_branch
      %43 = sbr.rel (0) target = $region37
    $region36: #{tpu_custom_call.1} parent=1 // pred_region
      %44 = dma.done [#allocation4], 6144
    $region37: #{tpu_custom_call.1} parent=1 // pred_fallthru
      _
    %v46 = vld [vmem:[#allocation3] sm:$0xff]
    %v47 = vld [vmem:[#allocation3 + $0x8] sm:$0xff]
    %v48 = vld [vmem:[#allocation3 + $0x10] sm:$0xff]
    %v49 = vld [vmem:[#allocation3 + $0x18] sm:$0xff]
    %v50 = vld [vmem:[#allocation3 + $0x20] sm:$0xff]
    %v51 = vld [vmem:[#allocation3 + $0x28] sm:$0xff]
    %v52 = vld [vmem:[#allocation3 + $0x30] sm:$0xff]
    %v53 = vld [vmem:[#allocation3 + $0x38] sm:$0xff]
    %v54 = vld [vmem:[#allocation3 + $0x40] sm:$0xff]
    %v55 = vld [vmem:[#allocation3 + $0x48] sm:$0xff]
    %v56 = vld [vmem:[#allocation3 + $0x50] sm:$0xff]
    %v57 = vld [vmem:[#allocation3 + $0x58] sm:$0xff]
    %v58 = vld [vmem:[#allocation3 + $0x60] sm:$0xff]
    %v59 = vld [vmem:[#allocation3 + $0x68] sm:$0xff]
    %v60 = vld [vmem:[#allocation3 + $0x70] sm:$0xff]
    %v61 = vld [vmem:[#allocation3 + $0x78] sm:$0xff]
    %s62 = scalar_lea.vmem [#allocation3], 128
    %v63 = vld [vmem:[%s62] sm:$0xff]
    %v64 = vld [vmem:[%s62 + $0x8] sm:$0xff]
    %v65 = vld [vmem:[%s62 + $0x10] sm:$0xff]
    %v66 = vld [vmem:[%s62 + $0x18] sm:$0xff]
    %v67 = vld [vmem:[%s62 + $0x20] sm:$0xff]
    %v68 = vld [vmem:[%s62 + $0x28] sm:$0xff]
    %v69 = vld [vmem:[%s62 + $0x30] sm:$0xff]
    %v70 = vld [vmem:[%s62 + $0x38] sm:$0xff]
    %v71 = vld [vmem:[%s62 + $0x40] sm:$0xff]
    %v72 = vld [vmem:[%s62 + $0x48] sm:$0xff]
    %v73 = vld [vmem:[%s62 + $0x50] sm:$0xff]
    %v74 = vld [vmem:[%s62 + $0x58] sm:$0xff]
    %v75 = vld [vmem:[%s62 + $0x60] sm:$0xff]
    %v76 = vld [vmem:[%s62 + $0x68] sm:$0xff]
    %v77 = vld [vmem:[%s62 + $0x70] sm:$0xff]
    %v78 = vld [vmem:[%s62 + $0x78] sm:$0xff]
    %s79 = scalar_lea.vmem [#allocation3], 256
    %v80 = vld [vmem:[%s79] sm:$0xff]
    %v81 = vld [vmem:[%s79 + $0x8] sm:$0xff]
    %v82 = vld [vmem:[%s79 + $0x10] sm:$0xff]
    %v83 = vld [vmem:[%s79 + $0x18] sm:$0xff]
    %v84 = vld [vmem:[%s79 + $0x20] sm:$0xff]
    %v85 = vld [vmem:[%s79 + $0x28] sm:$0xff]
    %v86 = vld [vmem:[%s79 + $0x30] sm:$0xff]
    %v87 = vld [vmem:[%s79 + $0x38] sm:$0xff]
    %v88 = vld [vmem:[%s79 + $0x40] sm:$0xff]
    %v89 = vld [vmem:[%s79 + $0x48] sm:$0xff]
    %v90 = vld [vmem:[%s79 + $0x50] sm:$0xff]
    %v91 = vld [vmem:[%s79 + $0x58] sm:$0xff]
    %v92 = vld [vmem:[%s79 + $0x60] sm:$0xff]
    %v93 = vld [vmem:[%s79 + $0x68] sm:$0xff]
    %v94 = vld [vmem:[%s79 + $0x70] sm:$0xff]
    %v95 = vld [vmem:[%s79 + $0x78] sm:$0xff]
    %v96 = vld [vmem:[%s2] sm:$0xff]
    %v97 = vld [vmem:[%s2 + $0x8] sm:$0xff]
    %v98 = vld [vmem:[%s2 + $0x10] sm:$0xff]
    %v99 = vld [vmem:[%s2 + $0x18] sm:$0xff]
    %v100 = vld [vmem:[%s2 + $0x20] sm:$0xff]
    %v101 = vld [vmem:[%s2 + $0x28] sm:$0xff]
    %v102 = vld [vmem:[%s2 + $0x30] sm:$0xff]
    %v103 = vld [vmem:[%s2 + $0x38] sm:$0xff]
    %v104 = vld [vmem:[%s2 + $0x40] sm:$0xff]
    %v105 = vld [vmem:[%s2 + $0x48] sm:$0xff]
    %v106 = vld [vmem:[%s2 + $0x50] sm:$0xff]
    %v107 = vld [vmem:[%s2 + $0x58] sm:$0xff]
    %v108 = vld [vmem:[%s2 + $0x60] sm:$0xff]
    %v109 = vld [vmem:[%s2 + $0x68] sm:$0xff]
    %v110 = vld [vmem:[%s2 + $0x70] sm:$0xff]
    %v111 = vld [vmem:[%s2 + $0x78] sm:$0xff]
    %113 = vset.pattern.permute.xlu0 0
    %114 = vperm.xlu0 %113, %v96
    %v115 = vpop.permute.xlu0 %114
    %118 = vset.pattern.permute.xlu0 0
    %119 = vperm.xlu0 %118, %v97
    %v120 = vpop.permute.xlu0 %119
    %123 = vset.pattern.permute.xlu0 0
    %124 = vperm.xlu0 %123, %v98
    %v125 = vpop.permute.xlu0 %124
    %128 = vset.pattern.permute.xlu0 0
    %129 = vperm.xlu0 %128, %v99
    %v130 = vpop.permute.xlu0 %129
    %133 = vset.pattern.permute.xlu0 0
    %134 = vperm.xlu0 %133, %v100
    %v135 = vpop.permute.xlu0 %134
    %138 = vset.pattern.permute.xlu0 0
    %139 = vperm.xlu0 %138, %v101
    %v140 = vpop.permute.xlu0 %139
    %143 = vset.pattern.permute.xlu0 0
    %144 = vperm.xlu0 %143, %v102
    %v145 = vpop.permute.xlu0 %144
    %148 = vset.pattern.permute.xlu0 0
    %149 = vperm.xlu0 %148, %v103
    %v150 = vpop.permute.xlu0 %149
    %153 = vset.pattern.permute.xlu0 0
    %154 = vperm.xlu0 %153, %v104
    %v155 = vpop.permute.xlu0 %154
    %158 = vset.pattern.permute.xlu0 0
    %159 = vperm.xlu0 %158, %v105
    %v160 = vpop.permute.xlu0 %159
    %163 = vset.pattern.permute.xlu0 0
    %164 = vperm.xlu0 %163, %v106
    %v165 = vpop.permute.xlu0 %164
    %168 = vset.pattern.permute.xlu0 0
    %169 = vperm.xlu0 %168, %v107
    %v170 = vpop.permute.xlu0 %169
    %173 = vset.pattern.permute.xlu0 0
    %174 = vperm.xlu0 %173, %v108
    %v175 = vpop.permute.xlu0 %174
    %178 = vset.pattern.permute.xlu0 0
    %179 = vperm.xlu0 %178, %v109
    %v180 = vpop.permute.xlu0 %179
    %183 = vset.pattern.permute.xlu0 0
    %184 = vperm.xlu0 %183, %v110
    %v185 = vpop.permute.xlu0 %184
    %188 = vset.pattern.permute.xlu0 0
    %189 = vperm.xlu0 %188, %v111
    %v190 = vpop.permute.xlu0 %189
    %v192 = vmul.f32 %v115, %v46
    %v193 = vmul.f32 %v120, %v47
    %v194 = vmul.f32 %v125, %v48
    %v195 = vmul.f32 %v130, %v49
    %v196 = vmul.f32 %v135, %v50
    %v197 = vmul.f32 %v140, %v51
    %v198 = vmul.f32 %v145, %v52
    %v199 = vmul.f32 %v150, %v53
    %v200 = vmul.f32 %v155, %v54
    %v201 = vmul.f32 %v160, %v55
    %v202 = vmul.f32 %v165, %v56
    %v203 = vmul.f32 %v170, %v57
    %v204 = vmul.f32 %v175, %v58
    %v205 = vmul.f32 %v180, %v59
    %v206 = vmul.f32 %v185, %v60
    %v207 = vmul.f32 %v190, %v61
    %208 = vset.pattern.permute.xlu0 1
    %209 = vperm.xlu0 %208, %v96
    %v210 = vpop.permute.xlu0 %209
    %212 = vset.pattern.permute.xlu0 1
    %213 = vperm.xlu0 %212, %v97
    %v214 = vpop.permute.xlu0 %213
    %216 = vset.pattern.permute.xlu0 1
    %217 = vperm.xlu0 %216, %v98
    %v218 = vpop.permute.xlu0 %217
    %220 = vset.pattern.permute.xlu0 1
    %221 = vperm.xlu0 %220, %v99
    %v222 = vpop.permute.xlu0 %221
    %224 = vset.pattern.permute.xlu0 1
    %225 = vperm.xlu0 %224, %v100
    %v226 = vpop.permute.xlu0 %225
    %228 = vset.pattern.permute.xlu0 1
    %229 = vperm.xlu0 %228, %v101
    %v230 = vpop.permute.xlu0 %229
    %232 = vset.pattern.permute.xlu0 1
    %233 = vperm.xlu0 %232, %v102
    %v234 = vpop.permute.xlu0 %233
    %236 = vset.pattern.permute.xlu0 1
    %237 = vperm.xlu0 %236, %v103
    %v238 = vpop.permute.xlu0 %237
    %240 = vset.pattern.permute.xlu0 1
    %241 = vperm.xlu0 %240, %v104
    %v242 = vpop.permute.xlu0 %241
    %244 = vset.pattern.permute.xlu0 1
    %245 = vperm.xlu0 %244, %v105
    %v246 = vpop.permute.xlu0 %245
    %248 = vset.pattern.permute.xlu0 1
    %249 = vperm.xlu0 %248, %v106
    %v250 = vpop.permute.xlu0 %249
    %252 = vset.pattern.permute.xlu0 1
    %253 = vperm.xlu0 %252, %v107
    %v254 = vpop.permute.xlu0 %253
    %256 = vset.pattern.permute.xlu0 1
    %257 = vperm.xlu0 %256, %v108
    %v258 = vpop.permute.xlu0 %257
    %260 = vset.pattern.permute.xlu0 1
    %261 = vperm.xlu0 %260, %v109
    %v262 = vpop.permute.xlu0 %261
    %264 = vset.pattern.permute.xlu0 1
    %265 = vperm.xlu0 %264, %v110
    %v266 = vpop.permute.xlu0 %265
    %268 = vset.pattern.permute.xlu0 1
    %269 = vperm.xlu0 %268, %v111
    %v270 = vpop.permute.xlu0 %269
    %v272 = vmul.f32 %v210, %v63
    %v273 = vmul.f32 %v214, %v64
    %v274 = vmul.f32 %v218, %v65
    %v275 = vmul.f32 %v222, %v66
    %v276 = vmul.f32 %v226, %v67
    %v277 = vmul.f32 %v230, %v68
    %v278 = vmul.f32 %v234, %v69
    %v279 = vmul.f32 %v238, %v70
    %v280 = vmul.f32 %v242, %v71
    %v281 = vmul.f32 %v246, %v72
    %v282 = vmul.f32 %v250, %v73
    %v283 = vmul.f32 %v254, %v74
    %v284 = vmul.f32 %v258, %v75
    %v285 = vmul.f32 %v262, %v76
    %v286 = vmul.f32 %v266, %v77
    %v287 = vmul.f32 %v270, %v78
    %v288 = vadd.f32 %v192, %v272
    %v289 = vadd.f32 %v193, %v273
    %v290 = vadd.f32 %v194, %v274
    %v291 = vadd.f32 %v195, %v275
    %v292 = vadd.f32 %v196, %v276
    %v293 = vadd.f32 %v197, %v277
    %v294 = vadd.f32 %v198, %v278
    %v295 = vadd.f32 %v199, %v279
    %v296 = vadd.f32 %v200, %v280
    %v297 = vadd.f32 %v201, %v281
    %v298 = vadd.f32 %v202, %v282
    %v299 = vadd.f32 %v203, %v283
    %v300 = vadd.f32 %v204, %v284
    %v301 = vadd.f32 %v205, %v285
    %v302 = vadd.f32 %v206, %v286
    %v303 = vadd.f32 %v207, %v287
    %304 = vset.pattern.permute.xlu0 2
    %305 = vperm.xlu0 %304, %v96
    %v306 = vpop.permute.xlu0 %305
    %308 = vset.pattern.permute.xlu0 2
    %309 = vperm.xlu0 %308, %v97
    %v310 = vpop.permute.xlu0 %309
    %312 = vset.pattern.permute.xlu0 2
    %313 = vperm.xlu0 %312, %v98
    %v314 = vpop.permute.xlu0 %313
    %316 = vset.pattern.permute.xlu0 2
    %317 = vperm.xlu0 %316, %v99
    %v318 = vpop.permute.xlu0 %317
    %320 = vset.pattern.permute.xlu0 2
    %321 = vperm.xlu0 %320, %v100
    %v322 = vpop.permute.xlu0 %321
    %324 = vset.pattern.permute.xlu0 2
    %325 = vperm.xlu0 %324, %v101
    %v326 = vpop.permute.xlu0 %325
    %328 = vset.pattern.permute.xlu0 2
    %329 = vperm.xlu0 %328, %v102
    %v330 = vpop.permute.xlu0 %329
    %332 = vset.pattern.permute.xlu0 2
    %333 = vperm.xlu0 %332, %v103
    %v334 = vpop.permute.xlu0 %333
    %336 = vset.pattern.permute.xlu0 2
    %337 = vperm.xlu0 %336, %v104
    %v338 = vpop.permute.xlu0 %337
    %340 = vset.pattern.permute.xlu0 2
    %341 = vperm.xlu0 %340, %v105
    %v342 = vpop.permute.xlu0 %341
    %344 = vset.pattern.permute.xlu0 2
    %345 = vperm.xlu0 %344, %v106
    %v346 = vpop.permute.xlu0 %345
    %348 = vset.pattern.permute.xlu0 2
    %349 = vperm.xlu0 %348, %v107
    %v350 = vpop.permute.xlu0 %349
    %352 = vset.pattern.permute.xlu0 2
    %353 = vperm.xlu0 %352, %v108
    %v354 = vpop.permute.xlu0 %353
    %356 = vset.pattern.permute.xlu0 2
    %357 = vperm.xlu0 %356, %v109
    %v358 = vpop.permute.xlu0 %357
    %360 = vset.pattern.permute.xlu0 2
    %361 = vperm.xlu0 %360, %v110
    %v362 = vpop.permute.xlu0 %361
    %364 = vset.pattern.permute.xlu0 2
    %365 = vperm.xlu0 %364, %v111
    %v366 = vpop.permute.xlu0 %365
    %v368 = vmul.f32 %v306, %v80
    %v369 = vmul.f32 %v310, %v81
    %v370 = vmul.f32 %v314, %v82
    %v371 = vmul.f32 %v318, %v83
    %v372 = vmul.f32 %v322, %v84
    %v373 = vmul.f32 %v326, %v85
    %v374 = vmul.f32 %v330, %v86
    %v375 = vmul.f32 %v334, %v87
    %v376 = vmul.f32 %v338, %v88
    %v377 = vmul.f32 %v342, %v89
    %v378 = vmul.f32 %v346, %v90
    %v379 = vmul.f32 %v350, %v91
    %v380 = vmul.f32 %v354, %v92
    %v381 = vmul.f32 %v358, %v93
    %v382 = vmul.f32 %v362, %v94
    %v383 = vmul.f32 %v366, %v95
    %v384 = vadd.f32 %v288, %v368
    %v385 = vadd.f32 %v289, %v369
    %v386 = vadd.f32 %v290, %v370
    %v387 = vadd.f32 %v291, %v371
    %v388 = vadd.f32 %v292, %v372
    %v389 = vadd.f32 %v293, %v373
    %v390 = vadd.f32 %v294, %v374
    %v391 = vadd.f32 %v295, %v375
    %v392 = vadd.f32 %v296, %v376
    %v393 = vadd.f32 %v297, %v377
    %v394 = vadd.f32 %v298, %v378
    %v395 = vadd.f32 %v299, %v379
    %v396 = vadd.f32 %v300, %v380
    %v397 = vadd.f32 %v301, %v381
    %v398 = vadd.f32 %v302, %v382
    %v399 = vadd.f32 %v303, %v383
    %400 = vset.pattern.permute.xlu0 3
    %401 = vperm.xlu0 %400, %v96
    %v402 = vpop.permute.xlu0 %401
    %404 = vset.pattern.permute.xlu0 3
    %405 = vperm.xlu0 %404, %v97
    %v406 = vpop.permute.xlu0 %405
    %408 = vset.pattern.permute.xlu0 3
    %409 = vperm.xlu0 %408, %v98
    %v410 = vpop.permute.xlu0 %409
    %412 = vset.pattern.permute.xlu0 3
    %413 = vperm.xlu0 %412, %v99
    %v414 = vpop.permute.xlu0 %413
    %416 = vset.pattern.permute.xlu0 3
    %417 = vperm.xlu0 %416, %v100
    %v418 = vpop.permute.xlu0 %417
    %420 = vset.pattern.permute.xlu0 3
    %421 = vperm.xlu0 %420, %v101
    %v422 = vpop.permute.xlu0 %421
    %424 = vset.pattern.permute.xlu0 3
    %425 = vperm.xlu0 %424, %v102
    %v426 = vpop.permute.xlu0 %425
    %428 = vset.pattern.permute.xlu0 3
    %429 = vperm.xlu0 %428, %v103
    %v430 = vpop.permute.xlu0 %429
    %432 = vset.pattern.permute.xlu0 3
    %433 = vperm.xlu0 %432, %v104
    %v434 = vpop.permute.xlu0 %433
    %436 = vset.pattern.permute.xlu0 3
    %437 = vperm.xlu0 %436, %v105
    %v438 = vpop.permute.xlu0 %437
    %440 = vset.pattern.permute.xlu0 3
    %441 = vperm.xlu0 %440, %v106
    %v442 = vpop.permute.xlu0 %441
    %444 = vset.pattern.permute.xlu0 3
    %445 = vperm.xlu0 %444, %v107
    %v446 = vpop.permute.xlu0 %445
    %448 = vset.pattern.permute.xlu0 3
    %449 = vperm.xlu0 %448, %v108
    %v450 = vpop.permute.xlu0 %449
    %452 = vset.pattern.permute.xlu0 3
    %453 = vperm.xlu0 %452, %v109
    %v454 = vpop.permute.xlu0 %453
    %456 = vset.pattern.permute.xlu0 3
    %457 = vperm.xlu0 %456, %v110
    %v458 = vpop.permute.xlu0 %457
    %460 = vset.pattern.permute.xlu0 3
    %461 = vperm.xlu0 %460, %v111
    %v462 = vpop.permute.xlu0 %461
    %v464 = vadd.f32 %v384, %v402
    %v465 = vadd.f32 %v385, %v406
    %v466 = vadd.f32 %v386, %v410
    %v467 = vadd.f32 %v387, %v414
    %v468 = vadd.f32 %v388, %v418
    %v469 = vadd.f32 %v389, %v422
    %v470 = vadd.f32 %v390, %v426
    %v471 = vadd.f32 %v391, %v430
    %v472 = vadd.f32 %v392, %v434
    %v473 = vadd.f32 %v393, %v438
    %v474 = vadd.f32 %v394, %v442
    %v475 = vadd.f32 %v395, %v446
    %v476 = vadd.f32 %v396, %v450
    %v477 = vadd.f32 %v397, %v454
    %v478 = vadd.f32 %v398, %v458
    %v479 = vadd.f32 %v399, %v462
    %v480 = vmax.f32 %v464, 0.0
    %v481 = vmax.f32 %v465, 0.0
    %v482 = vmax.f32 %v466, 0.0
    %v483 = vmax.f32 %v467, 0.0
    %v484 = vmax.f32 %v468, 0.0
    %v485 = vmax.f32 %v469, 0.0
    %v486 = vmax.f32 %v470, 0.0
    %v487 = vmax.f32 %v471, 0.0
    %v488 = vmax.f32 %v472, 0.0
    %v489 = vmax.f32 %v473, 0.0
    %v490 = vmax.f32 %v474, 0.0
    %v491 = vmax.f32 %v475, 0.0
    %v492 = vmax.f32 %v476, 0.0
    %v493 = vmax.f32 %v477, 0.0
    %v494 = vmax.f32 %v478, 0.0
    %v495 = vmax.f32 %v479, 0.0
    %v496 = vld [vmem:[%s3] sm:$0xf]
    %v497 = vld [vmem:[%s3 + $0x4] sm:$0xf]
    %v498 = vld [vmem:[%s3 + $0x8] sm:$0xf]
    %v499 = vld [vmem:[%s3 + $0xc] sm:$0xf]
    %v500 = vpack.c.bf16 %v481, %v480
    %v501 = vpack.c.bf16 %v483, %v482
    %v502 = vpack.c.bf16 %v485, %v484
    %v503 = vpack.c.bf16 %v487, %v486
    %v504 = vpack.c.bf16 %v489, %v488
    %v505 = vpack.c.bf16 %v491, %v490
    %v506 = vpack.c.bf16 %v493, %v492
    %v507 = vpack.c.bf16 %v495, %v494
    %508 = vset.pattern.permute.xlu0 4
    %509 = vperm.xlu0 %508, %v96
    %v510 = vpop.permute.xlu0 %509
    %512 = vset.pattern.permute.xlu0 4
    %513 = vperm.xlu0 %512, %v97
    %v514 = vpop.permute.xlu0 %513
    %516 = vset.pattern.permute.xlu0 4
    %517 = vperm.xlu0 %516, %v98
    %v518 = vpop.permute.xlu0 %517
    %520 = vset.pattern.permute.xlu0 4
    %521 = vperm.xlu0 %520, %v99
    %v522 = vpop.permute.xlu0 %521
    %524 = vset.pattern.permute.xlu0 4
    %525 = vperm.xlu0 %524, %v100
    %v526 = vpop.permute.xlu0 %525
    %528 = vset.pattern.permute.xlu0 4
    %529 = vperm.xlu0 %528, %v101
    %v530 = vpop.permute.xlu0 %529
    %532 = vset.pattern.permute.xlu0 4
    %533 = vperm.xlu0 %532, %v102
    %v534 = vpop.permute.xlu0 %533
    %536 = vset.pattern.permute.xlu0 4
    %537 = vperm.xlu0 %536, %v103
    %v538 = vpop.permute.xlu0 %537
    %540 = vset.pattern.permute.xlu0 4
    %541 = vperm.xlu0 %540, %v104
    %v542 = vpop.permute.xlu0 %541
    %544 = vset.pattern.permute.xlu0 4
    %545 = vperm.xlu0 %544, %v105
    %v546 = vpop.permute.xlu0 %545
    %548 = vset.pattern.permute.xlu0 4
    %549 = vperm.xlu0 %548, %v106
    %v550 = vpop.permute.xlu0 %549
    %552 = vset.pattern.permute.xlu0 4
    %553 = vperm.xlu0 %552, %v107
    %v554 = vpop.permute.xlu0 %553
    %556 = vset.pattern.permute.xlu0 4
    %557 = vperm.xlu0 %556, %v108
    %v558 = vpop.permute.xlu0 %557
    %560 = vset.pattern.permute.xlu0 4
    %561 = vperm.xlu0 %560, %v109
    %v562 = vpop.permute.xlu0 %561
    %564 = vset.pattern.permute.xlu0 4
    %565 = vperm.xlu0 %564, %v110
    %v566 = vpop.permute.xlu0 %565
    %568 = vset.pattern.permute.xlu0 4
    %569 = vperm.xlu0 %568, %v111
    %v570 = vpop.permute.xlu0 %569
    %v572 = vmul.f32 %v510, %v46
    %v573 = vmul.f32 %v514, %v47
    %v574 = vmul.f32 %v518, %v48
    %v575 = vmul.f32 %v522, %v49
    %v576 = vmul.f32 %v526, %v50
    %v577 = vmul.f32 %v530, %v51
    %v578 = vmul.f32 %v534, %v52
    %v579 = vmul.f32 %v538, %v53
    %v580 = vmul.f32 %v542, %v54
    %v581 = vmul.f32 %v546, %v55
    %v582 = vmul.f32 %v550, %v56
    %v583 = vmul.f32 %v554, %v57
    %v584 = vmul.f32 %v558, %v58
    %v585 = vmul.f32 %v562, %v59
    %v586 = vmul.f32 %v566, %v60
    %v587 = vmul.f32 %v570, %v61
    %588 = vset.pattern.permute.xlu0 5
    %589 = vperm.xlu0 %588, %v96
    %v590 = vpop.permute.xlu0 %589
    %592 = vset.pattern.permute.xlu0 5
    %593 = vperm.xlu0 %592, %v97
    %v594 = vpop.permute.xlu0 %593
    %596 = vset.pattern.permute.xlu0 5
    %597 = vperm.xlu0 %596, %v98
    %v598 = vpop.permute.xlu0 %597
    %600 = vset.pattern.permute.xlu0 5
    %601 = vperm.xlu0 %600, %v99
    %v602 = vpop.permute.xlu0 %601
    %604 = vset.pattern.permute.xlu0 5
    %605 = vperm.xlu0 %604, %v100
    %v606 = vpop.permute.xlu0 %605
    %608 = vset.pattern.permute.xlu0 5
    %609 = vperm.xlu0 %608, %v101
    %v610 = vpop.permute.xlu0 %609
    %612 = vset.pattern.permute.xlu0 5
    %613 = vperm.xlu0 %612, %v102
    %v614 = vpop.permute.xlu0 %613
    %616 = vset.pattern.permute.xlu0 5
    %617 = vperm.xlu0 %616, %v103
    %v618 = vpop.permute.xlu0 %617
    %620 = vset.pattern.permute.xlu0 5
    %621 = vperm.xlu0 %620, %v104
    %v622 = vpop.permute.xlu0 %621
    %624 = vset.pattern.permute.xlu0 5
    %625 = vperm.xlu0 %624, %v105
    %v626 = vpop.permute.xlu0 %625
    %628 = vset.pattern.permute.xlu0 5
    %629 = vperm.xlu0 %628, %v106
    %v630 = vpop.permute.xlu0 %629
    %632 = vset.pattern.permute.xlu0 5
    %633 = vperm.xlu0 %632, %v107
    %v634 = vpop.permute.xlu0 %633
    %636 = vset.pattern.permute.xlu0 5
    %637 = vperm.xlu0 %636, %v108
    %v638 = vpop.permute.xlu0 %637
    %640 = vset.pattern.permute.xlu0 5
    %641 = vperm.xlu0 %640, %v109
    %v642 = vpop.permute.xlu0 %641
    %644 = vset.pattern.permute.xlu0 5
    %645 = vperm.xlu0 %644, %v110
    %v646 = vpop.permute.xlu0 %645
    %648 = vset.pattern.permute.xlu0 5
    %649 = vperm.xlu0 %648, %v111
    %v650 = vpop.permute.xlu0 %649
    %v652 = vmul.f32 %v590, %v63
    %v653 = vmul.f32 %v594, %v64
    %v654 = vmul.f32 %v598, %v65
    %v655 = vmul.f32 %v602, %v66
    %v656 = vmul.f32 %v606, %v67
    %v657 = vmul.f32 %v610, %v68
    %v658 = vmul.f32 %v614, %v69
    %v659 = vmul.f32 %v618, %v70
    %v660 = vmul.f32 %v622, %v71
    %v661 = vmul.f32 %v626, %v72
    %v662 = vmul.f32 %v630, %v73
    %v663 = vmul.f32 %v634, %v74
    %v664 = vmul.f32 %v638, %v75
    %v665 = vmul.f32 %v642, %v76
    %v666 = vmul.f32 %v646, %v77
    %v667 = vmul.f32 %v650, %v78
    %v668 = vadd.f32 %v572, %v652
    %v669 = vadd.f32 %v573, %v653
    %v670 = vadd.f32 %v574, %v654
    %v671 = vadd.f32 %v575, %v655
    %v672 = vadd.f32 %v576, %v656
    %v673 = vadd.f32 %v577, %v657
    %v674 = vadd.f32 %v578, %v658
    %v675 = vadd.f32 %v579, %v659
    %v676 = vadd.f32 %v580, %v660
    %v677 = vadd.f32 %v581, %v661
    %v678 = vadd.f32 %v582, %v662
    %v679 = vadd.f32 %v583, %v663
    %v680 = vadd.f32 %v584, %v664
    %v681 = vadd.f32 %v585, %v665
    %v682 = vadd.f32 %v586, %v666
    %v683 = vadd.f32 %v587, %v667
    %684 = vset.pattern.permute.xlu0 6
    %685 = vperm.xlu0 %684, %v96
    %v686 = vpop.permute.xlu0 %685
    %688 = vset.pattern.permute.xlu0 6
    %689 = vperm.xlu0 %688, %v97
    %v690 = vpop.permute.xlu0 %689
    %692 = vset.pattern.permute.xlu0 6
    %693 = vperm.xlu0 %692, %v98
    %v694 = vpop.permute.xlu0 %693
    %696 = vset.pattern.permute.xlu0 6
    %697 = vperm.xlu0 %696, %v99
    %v698 = vpop.permute.xlu0 %697
    %700 = vset.pattern.permute.xlu0 6
    %701 = vperm.xlu0 %700, %v100
    %v702 = vpop.permute.xlu0 %701
    %704 = vset.pattern.permute.xlu0 6
    %705 = vperm.xlu0 %704, %v101
    %v706 = vpop.permute.xlu0 %705
    %708 = vset.pattern.permute.xlu0 6
    %709 = vperm.xlu0 %708, %v102
    %v710 = vpop.permute.xlu0 %709
    %712 = vset.pattern.permute.xlu0 6
    %713 = vperm.xlu0 %712, %v103
    %v714 = vpop.permute.xlu0 %713
    %716 = vset.pattern.permute.xlu0 6
    %717 = vperm.xlu0 %716, %v104
    %v718 = vpop.permute.xlu0 %717
    %720 = vset.pattern.permute.xlu0 6
    %721 = vperm.xlu0 %720, %v105
    %v722 = vpop.permute.xlu0 %721
    %724 = vset.pattern.permute.xlu0 6
    %725 = vperm.xlu0 %724, %v106
    %v726 = vpop.permute.xlu0 %725
    %728 = vset.pattern.permute.xlu0 6
    %729 = vperm.xlu0 %728, %v107
    %v730 = vpop.permute.xlu0 %729
    %732 = vset.pattern.permute.xlu0 6
    %733 = vperm.xlu0 %732, %v108
    %v734 = vpop.permute.xlu0 %733
    %736 = vset.pattern.permute.xlu0 6
    %737 = vperm.xlu0 %736, %v109
    %v738 = vpop.permute.xlu0 %737
    %740 = vset.pattern.permute.xlu0 6
    %741 = vperm.xlu0 %740, %v110
    %v742 = vpop.permute.xlu0 %741
    %744 = vset.pattern.permute.xlu0 6
    %745 = vperm.xlu0 %744, %v111
    %v746 = vpop.permute.xlu0 %745
    %v748 = vmul.f32 %v686, %v80
    %v749 = vmul.f32 %v690, %v81
    %v750 = vmul.f32 %v694, %v82
    %v751 = vmul.f32 %v698, %v83
    %v752 = vmul.f32 %v702, %v84
    %v753 = vmul.f32 %v706, %v85
    %v754 = vmul.f32 %v710, %v86
    %v755 = vmul.f32 %v714, %v87
    %v756 = vmul.f32 %v718, %v88
    %v757 = vmul.f32 %v722, %v89
    %v758 = vmul.f32 %v726, %v90
    %v759 = vmul.f32 %v730, %v91
    %v760 = vmul.f32 %v734, %v92
    %v761 = vmul.f32 %v738, %v93
    %v762 = vmul.f32 %v742, %v94
    %v763 = vmul.f32 %v746, %v95
    %v764 = vadd.f32 %v668, %v748
    %v765 = vadd.f32 %v669, %v749
    %v766 = vadd.f32 %v670, %v750
    %v767 = vadd.f32 %v671, %v751
    %v768 = vadd.f32 %v672, %v752
    %v769 = vadd.f32 %v673, %v753
    %v770 = vadd.f32 %v674, %v754
    %v771 = vadd.f32 %v675, %v755
    %v772 = vadd.f32 %v676, %v756
    %v773 = vadd.f32 %v677, %v757
    %v774 = vadd.f32 %v678, %v758
    %v775 = vadd.f32 %v679, %v759
    %v776 = vadd.f32 %v680, %v760
    %v777 = vadd.f32 %v681, %v761
    %v778 = vadd.f32 %v682, %v762
    %v779 = vadd.f32 %v683, %v763
    %780 = vset.pattern.permute.xlu0 7
    %781 = vperm.xlu0 %780, %v96
    %v782 = vpop.permute.xlu0 %781
    %784 = vset.pattern.permute.xlu0 7
    %785 = vperm.xlu0 %784, %v97
    %v786 = vpop.permute.xlu0 %785
    %788 = vset.pattern.permute.xlu0 7
    %789 = vperm.xlu0 %788, %v98
    %v790 = vpop.permute.xlu0 %789
    %792 = vset.pattern.permute.xlu0 7
    %793 = vperm.xlu0 %792, %v99
    %v794 = vpop.permute.xlu0 %793
    %796 = vset.pattern.permute.xlu0 7
    %797 = vperm.xlu0 %796, %v100
    %v798 = vpop.permute.xlu0 %797
    %800 = vset.pattern.permute.xlu0 7
    %801 = vperm.xlu0 %800, %v101
    %v802 = vpop.permute.xlu0 %801
    %804 = vset.pattern.permute.xlu0 7
    %805 = vperm.xlu0 %804, %v102
    %v806 = vpop.permute.xlu0 %805
    %808 = vset.pattern.permute.xlu0 7
    %809 = vperm.xlu0 %808, %v103
    %v810 = vpop.permute.xlu0 %809
    %812 = vset.pattern.permute.xlu0 7
    %813 = vperm.xlu0 %812, %v104
    %v814 = vpop.permute.xlu0 %813
    %816 = vset.pattern.permute.xlu0 7
    %817 = vperm.xlu0 %816, %v105
    %v818 = vpop.permute.xlu0 %817
    %820 = vset.pattern.permute.xlu0 7
    %821 = vperm.xlu0 %820, %v106
    %v822 = vpop.permute.xlu0 %821
    %824 = vset.pattern.permute.xlu0 7
    %825 = vperm.xlu0 %824, %v107
    %v826 = vpop.permute.xlu0 %825
    %828 = vset.pattern.permute.xlu0 7
    %829 = vperm.xlu0 %828, %v108
    %v830 = vpop.permute.xlu0 %829
    %832 = vset.pattern.permute.xlu0 7
    %833 = vperm.xlu0 %832, %v109
    %v834 = vpop.permute.xlu0 %833
    %836 = vset.pattern.permute.xlu0 7
    %837 = vperm.xlu0 %836, %v110
    %v838 = vpop.permute.xlu0 %837
    %840 = vset.pattern.permute.xlu0 7
    %841 = vperm.xlu0 %840, %v111
    %v842 = vpop.permute.xlu0 %841
    %v844 = vadd.f32 %v764, %v782
    %v845 = vadd.f32 %v765, %v786
    %v846 = vadd.f32 %v766, %v790
    %v847 = vadd.f32 %v767, %v794
    %v848 = vadd.f32 %v768, %v798
    %v849 = vadd.f32 %v769, %v802
    %v850 = vadd.f32 %v770, %v806
    %v851 = vadd.f32 %v771, %v810
    %v852 = vadd.f32 %v772, %v814
    %v853 = vadd.f32 %v773, %v818
    %v854 = vadd.f32 %v774, %v822
    %v855 = vadd.f32 %v775, %v826
    %v856 = vadd.f32 %v776, %v830
    %v857 = vadd.f32 %v777, %v834
    %v858 = vadd.f32 %v778, %v838
    %v859 = vadd.f32 %v779, %v842
    %v860 = vmax.f32 %v844, 0.0
    %v861 = vmax.f32 %v845, 0.0
    %v862 = vmax.f32 %v846, 0.0
    %v863 = vmax.f32 %v847, 0.0
    %v864 = vmax.f32 %v848, 0.0
    %v865 = vmax.f32 %v849, 0.0
    %v866 = vmax.f32 %v850, 0.0
    %v867 = vmax.f32 %v851, 0.0
    %v868 = vmax.f32 %v852, 0.0
    %v869 = vmax.f32 %v853, 0.0
    %v870 = vmax.f32 %v854, 0.0
    %v871 = vmax.f32 %v855, 0.0
    %v872 = vmax.f32 %v856, 0.0
    %v873 = vmax.f32 %v857, 0.0
    %v874 = vmax.f32 %v858, 0.0
    %v875 = vmax.f32 %v859, 0.0
    %s876 = scalar_lea.vmem %s3, 16
    %v877 = vld [vmem:[%s876] sm:$0xf]
    %v878 = vld [vmem:[%s876 + $0x4] sm:$0xf]
    %v879 = vld [vmem:[%s876 + $0x8] sm:$0xf]
    %v880 = vld [vmem:[%s876 + $0xc] sm:$0xf]
    %v881 = vpack.c.bf16 %v861, %v860
    %v882 = vpack.c.bf16 %v863, %v862
    %v883 = vpack.c.bf16 %v865, %v864
    %v884 = vpack.c.bf16 %v867, %v866
    %v885 = vpack.c.bf16 %v869, %v868
    %v886 = vpack.c.bf16 %v871, %v870
    %v887 = vpack.c.bf16 %v873, %v872
    %v888 = vpack.c.bf16 %v875, %v874
    %v893 = vunpack.c.l.b16 %v877
    %v894 = vunpack.c.l.b16 %v878
    %v895 = vunpack.c.l.b16 %v879
    %v896 = vunpack.c.l.b16 %v880
    %v897 = vpack.c.b16 %v894, %v893
    %v898 = vpack.c.b16 %v896, %v895
    %901 = vmatprep.subr.bf16.mxu0 0
    %902 = vmatpush1.bf16.msra.mxu0 %v881
    %903 = vmatprep.subr.bf16.mxu0 0
    %904 = vmatpush1.bf16.msra.mxu0 %v882
    %905 = vmatprep.subr.bf16.mxu0 0
    %906 = vmatpush1.bf16.msra.mxu0 %v883
    %907 = vmatprep.subr.bf16.mxu0 0
    %908 = vmatpush1.bf16.msra.mxu0 %v884
    %909 = vmatprep.subr.bf16.mxu0 0
    %910 = vmatpush1.bf16.msra.mxu0 %v885
    %911 = vmatprep.subr.bf16.mxu0 0
    %912 = vmatpush1.bf16.msra.mxu0 %v886
    %913 = vmatprep.subr.bf16.mxu0 0
    %914 = vmatpush1.bf16.msra.mxu0 %v887
    %915 = vmatprep.subr.bf16.mxu0 0
    %916 = vmatpush1.bf16.msra.mxu0 %v888
    %917 = vmatprep.subr.bf16.mxu0 0
    %918 = vmatpush1.bf16.msra.mxu0 0
    %919 = vmatprep.subr.bf16.mxu0 0
    %920 = vmatpush1.bf16.msra.mxu0 0
    %921 = vmatprep.subr.bf16.mxu0 0
    %922 = vmatpush1.bf16.msra.mxu0 0
    %923 = vmatprep.subr.bf16.mxu0 0
    %924 = vmatpush1.bf16.msra.mxu0 0
    %925 = vmatprep.subr.bf16.mxu0 0
    %926 = vmatpush1.bf16.msra.mxu0 0
    %927 = vmatprep.subr.bf16.mxu0 0
    %928 = vmatpush1.bf16.msra.mxu0 0
    %929 = vmatprep.subr.bf16.mxu0 0
    %930 = vmatpush1.bf16.msra.mxu0 0
    %931 = vmatprep.subr.bf16.mxu0 0
    %932 = vmatpush1.bf16.msra.mxu0 0
    %933 = vmatprep.mubr.bf16.mxu0 0
    %934 = vmatmul.mubr.bf16.gmra.mrb[0].mxu0 %v897
    %v935 = vpop.f32.mrb[0].mxu0
    %v936 = vadd.f32 0.0, %v935
    %v937 = vpop.f32.mrb[0].mxu0
    %v938 = vpop.f32.mrb[0].mxu0
    %v939 = vadd.f32 0.0, %v938
    %v940 = vpop.f32.mrb[0].mxu0
    %941 = vmatprep.mubr.bf16.mxu0 0
    %942 = vmatmul.mubr.bf16.gmra.mrb[0].mxu0 %v898
    %v943 = vpop.f32.mrb[0].mxu0
    %v944 = vadd.f32 0.0, %v943
    %v945 = vpop.f32.mrb[0].mxu0
    %v946 = vpop.f32.mrb[0].mxu0
    %v947 = vadd.f32 0.0, %v946
    %v948 = vpop.f32.mrb[0].mxu0
    %949 = vdwg.mxu0
    %v954 = vunpack.c.l.b16 %v496
    %v955 = vunpack.c.l.b16 %v497
    %v956 = vunpack.c.l.b16 %v498
    %v957 = vunpack.c.l.b16 %v499
    %v958 = vpack.c.b16 %v955, %v954
    %v959 = vpack.c.b16 %v957, %v956
    %962 = vmatprep.subr.bf16.mxu0 0
    %963 = vmatpush1.bf16.msra.mxu0 %v500
    %964 = vmatprep.subr.bf16.mxu0 0
    %965 = vmatpush1.bf16.msra.mxu0 %v501
    %966 = vmatprep.subr.bf16.mxu0 0
    %967 = vmatpush1.bf16.msra.mxu0 %v502
    %968 = vmatprep.subr.bf16.mxu0 0
    %969 = vmatpush1.bf16.msra.mxu0 %v503
    %970 = vmatprep.subr.bf16.mxu0 0
    %971 = vmatpush1.bf16.msra.mxu0 %v504
    %972 = vmatprep.subr.bf16.mxu0 0
    %973 = vmatpush1.bf16.msra.mxu0 %v505
    %974 = vmatprep.subr.bf16.mxu0 0
    %975 = vmatpush1.bf16.msra.mxu0 %v506
    %976 = vmatprep.subr.bf16.mxu0 0
    %977 = vmatpush1.bf16.msra.mxu0 %v507
    %978 = vmatprep.subr.bf16.mxu0 0
    %979 = vmatpush1.bf16.msra.mxu0 0
    %980 = vmatprep.subr.bf16.mxu0 0
    %981 = vmatpush1.bf16.msra.mxu0 0
    %982 = vmatprep.subr.bf16.mxu0 0
    %983 = vmatpush1.bf16.msra.mxu0 0
    %984 = vmatprep.subr.bf16.mxu0 0
    %985 = vmatpush1.bf16.msra.mxu0 0
    %986 = vmatprep.subr.bf16.mxu0 0
    %987 = vmatpush1.bf16.msra.mxu0 0
    %988 = vmatprep.subr.bf16.mxu0 0
    %989 = vmatpush1.bf16.msra.mxu0 0
    %990 = vmatprep.subr.bf16.mxu0 0
    %991 = vmatpush1.bf16.msra.mxu0 0
    %992 = vmatprep.subr.bf16.mxu0 0
    %993 = vmatpush1.bf16.msra.mxu0 0
    %994 = vmatprep.mubr.bf16.mxu0 0
    %995 = vmatmul.mubr.bf16.gmra.mrb[0].mxu0 %v958
    %v996 = vpop.f32.mrb[0].mxu0
    %v997 = vadd.f32 %v936, %v996
    %v998 = vpop.f32.mrb[0].mxu0
    %v999 = vpop.f32.mrb[0].mxu0
    %v1000 = vadd.f32 %v939, %v999
    %v1001 = vpop.f32.mrb[0].mxu0
    %1002 = vmatprep.mubr.bf16.mxu0 0
    %1003 = vmatmul.mubr.bf16.gmra.mrb[0].mxu0 %v959
    %v1004 = vpop.f32.mrb[0].mxu0
    %v1005 = vadd.f32 %v944, %v1004
    %v1006 = vpop.f32.mrb[0].mxu0
    %v1007 = vpop.f32.mrb[0].mxu0
    %v1008 = vadd.f32 %v947, %v1007
    %v1009 = vpop.f32.mrb[0].mxu0
    %1010 = vdwg.mxu0
    %1011 = vset.pattern.permute.xlu0 8
    %1012 = vperm.xlu0 %1011, %v96
    %v1013 = vpop.permute.xlu0 %1012
    %1015 = vset.pattern.permute.xlu0 8
    %1016 = vperm.xlu0 %1015, %v97
    %v1017 = vpop.permute.xlu0 %1016
    %1019 = vset.pattern.permute.xlu0 8
    %1020 = vperm.xlu0 %1019, %v98
    %v1021 = vpop.permute.xlu0 %1020
    %1023 = vset.pattern.permute.xlu0 8
    %1024 = vperm.xlu0 %1023, %v99
    %v1025 = vpop.permute.xlu0 %1024
    %1027 = vset.pattern.permute.xlu0 8
    %1028 = vperm.xlu0 %1027, %v100
    %v1029 = vpop.permute.xlu0 %1028
    %1031 = vset.pattern.permute.xlu0 8
    %1032 = vperm.xlu0 %1031, %v101
    %v1033 = vpop.permute.xlu0 %1032
    %1035 = vset.pattern.permute.xlu0 8
    %1036 = vperm.xlu0 %1035, %v102
    %v1037 = vpop.permute.xlu0 %1036
    %1039 = vset.pattern.permute.xlu0 8
    %1040 = vperm.xlu0 %1039, %v103
    %v1041 = vpop.permute.xlu0 %1040
    %1043 = vset.pattern.permute.xlu0 8
    %1044 = vperm.xlu0 %1043, %v104
    %v1045 = vpop.permute.xlu0 %1044
    %1047 = vset.pattern.permute.xlu0 8
    %1048 = vperm.xlu0 %1047, %v105
    %v1049 = vpop.permute.xlu0 %1048
    %1051 = vset.pattern.permute.xlu0 8
    %1052 = vperm.xlu0 %1051, %v106
    %v1053 = vpop.permute.xlu0 %1052
    %1055 = vset.pattern.permute.xlu0 8
    %1056 = vperm.xlu0 %1055, %v107
    %v1057 = vpop.permute.xlu0 %1056
    %1059 = vset.pattern.permute.xlu0 8
    %1060 = vperm.xlu0 %1059, %v108
    %v1061 = vpop.permute.xlu0 %1060
    %1063 = vset.pattern.permute.xlu0 8
    %1064 = vperm.xlu0 %1063, %v109
    %v1065 = vpop.permute.xlu0 %1064
    %1067 = vset.pattern.permute.xlu0 8
    %1068 = vperm.xlu0 %1067, %v110
    %v1069 = vpop.permute.xlu0 %1068
    %1071 = vset.pattern.permute.xlu0 8
    %1072 = vperm.xlu0 %1071, %v111
    %v1073 = vpop.permute.xlu0 %1072
    %v1075 = vmul.f32 %v1013, %v46
    %v1076 = vmul.f32 %v1017, %v47
    %v1077 = vmul.f32 %v1021, %v48
    %v1078 = vmul.f32 %v1025, %v49
    %v1079 = vmul.f32 %v1029, %v50
    %v1080 = vmul.f32 %v1033, %v51
    %v1081 = vmul.f32 %v1037, %v52
    %v1082 = vmul.f32 %v1041, %v53
    %v1083 = vmul.f32 %v1045, %v54
    %v1084 = vmul.f32 %v1049, %v55
    %v1085 = vmul.f32 %v1053, %v56
    %v1086 = vmul.f32 %v1057, %v57
    %v1087 = vmul.f32 %v1061, %v58
    %v1088 = vmul.f32 %v1065, %v59
    %v1089 = vmul.f32 %v1069, %v60
    %v1090 = vmul.f32 %v1073, %v61
    %1091 = vset.pattern.permute.xlu0 9
    %1092 = vperm.xlu0 %1091, %v96
    %v1093 = vpop.permute.xlu0 %1092
    %1095 = vset.pattern.permute.xlu0 9
    %1096 = vperm.xlu0 %1095, %v97
    %v1097 = vpop.permute.xlu0 %1096
    %1099 = vset.pattern.permute.xlu0 9
    %1100 = vperm.xlu0 %1099, %v98
    %v1101 = vpop.permute.xlu0 %1100
    %1103 = vset.pattern.permute.xlu0 9
    %1104 = vperm.xlu0 %1103, %v99
    %v1105 = vpop.permute.xlu0 %1104
    %1107 = vset.pattern.permute.xlu0 9
    %1108 = vperm.xlu0 %1107, %v100
    %v1109 = vpop.permute.xlu0 %1108
    %1111 = vset.pattern.permute.xlu0 9
    %1112 = vperm.xlu0 %1111, %v101
    %v1113 = vpop.permute.xlu0 %1112
    %1115 = vset.pattern.permute.xlu0 9
    %1116 = vperm.xlu0 %1115, %v102
    %v1117 = vpop.permute.xlu0 %1116
    %1119 = vset.pattern.permute.xlu0 9
    %1120 = vperm.xlu0 %1119, %v103
    %v1121 = vpop.permute.xlu0 %1120
    %1123 = vset.pattern.permute.xlu0 9
    %1124 = vperm.xlu0 %1123, %v104
    %v1125 = vpop.permute.xlu0 %1124
    %1127 = vset.pattern.permute.xlu0 9
    %1128 = vperm.xlu0 %1127, %v105
    %v1129 = vpop.permute.xlu0 %1128
    %1131 = vset.pattern.permute.xlu0 9
    %1132 = vperm.xlu0 %1131, %v106
    %v1133 = vpop.permute.xlu0 %1132
    %1135 = vset.pattern.permute.xlu0 9
    %1136 = vperm.xlu0 %1135, %v107
    %v1137 = vpop.permute.xlu0 %1136
    %1139 = vset.pattern.permute.xlu0 9
    %1140 = vperm.xlu0 %1139, %v108
    %v1141 = vpop.permute.xlu0 %1140
    %1143 = vset.pattern.permute.xlu0 9
    %1144 = vperm.xlu0 %1143, %v109
    %v1145 = vpop.permute.xlu0 %1144
    %1147 = vset.pattern.permute.xlu0 9
    %1148 = vperm.xlu0 %1147, %v110
    %v1149 = vpop.permute.xlu0 %1148
    %1151 = vset.pattern.permute.xlu0 9
    %1152 = vperm.xlu0 %1151, %v111
    %v1153 = vpop.permute.xlu0 %1152
    %v1155 = vmul.f32 %v1093, %v63
    %v1156 = vmul.f32 %v1097, %v64
    %v1157 = vmul.f32 %v1101, %v65
    %v1158 = vmul.f32 %v1105, %v66
    %v1159 = vmul.f32 %v1109, %v67
    %v1160 = vmul.f32 %v1113, %v68
    %v1161 = vmul.f32 %v1117, %v69
    %v1162 = vmul.f32 %v1121, %v70
    %v1163 = vmul.f32 %v1125, %v71
    %v1164 = vmul.f32 %v1129, %v72
    %v1165 = vmul.f32 %v1133, %v73
    %v1166 = vmul.f32 %v1137, %v74
    %v1167 = vmul.f32 %v1141, %v75
    %v1168 = vmul.f32 %v1145, %v76
    %v1169 = vmul.f32 %v1149, %v77
    %v1170 = vmul.f32 %v1153, %v78
    %v1171 = vadd.f32 %v1075, %v1155
    %v1172 = vadd.f32 %v1076, %v1156
    %v1173 = vadd.f32 %v1077, %v1157
    %v1174 = vadd.f32 %v1078, %v1158
    %v1175 = vadd.f32 %v1079, %v1159
    %v1176 = vadd.f32 %v1080, %v1160
    %v1177 = vadd.f32 %v1081, %v1161
    %v1178 = vadd.f32 %v1082, %v1162
    %v1179 = vadd.f32 %v1083, %v1163
    %v1180 = vadd.f32 %v1084, %v1164
    %v1181 = vadd.f32 %v1085, %v1165
    %v1182 = vadd.f32 %v1086, %v1166
    %v1183 = vadd.f32 %v1087, %v1167
    %v1184 = vadd.f32 %v1088, %v1168
    %v1185 = vadd.f32 %v1089, %v1169
    %v1186 = vadd.f32 %v1090, %v1170
    %1187 = vset.pattern.permute.xlu0 10
    %1188 = vperm.xlu0 %1187, %v96
    %v1189 = vpop.permute.xlu0 %1188
    %1191 = vset.pattern.permute.xlu0 10
    %1192 = vperm.xlu0 %1191, %v97
    %v1193 = vpop.permute.xlu0 %1192
    %1195 = vset.pattern.permute.xlu0 10
    %1196 = vperm.xlu0 %1195, %v98
    %v1197 = vpop.permute.xlu0 %1196
    %1199 = vset.pattern.permute.xlu0 10
    %1200 = vperm.xlu0 %1199, %v99
    %v1201 = vpop.permute.xlu0 %1200
    %1203 = vset.pattern.permute.xlu0 10
    %1204 = vperm.xlu0 %1203, %v100
    %v1205 = vpop.permute.xlu0 %1204
    %1207 = vset.pattern.permute.xlu0 10
    %1208 = vperm.xlu0 %1207, %v101
    %v1209 = vpop.permute.xlu0 %1208
    %1211 = vset.pattern.permute.xlu0 10
    %1212 = vperm.xlu0 %1211, %v102
    %v1213 = vpop.permute.xlu0 %1212
    %1215 = vset.pattern.permute.xlu0 10
    %1216 = vperm.xlu0 %1215, %v103
    %v1217 = vpop.permute.xlu0 %1216
    %1219 = vset.pattern.permute.xlu0 10
    %1220 = vperm.xlu0 %1219, %v104
    %v1221 = vpop.permute.xlu0 %1220
    %1223 = vset.pattern.permute.xlu0 10
    %1224 = vperm.xlu0 %1223, %v105
    %v1225 = vpop.permute.xlu0 %1224
    %1227 = vset.pattern.permute.xlu0 10
    %1228 = vperm.xlu0 %1227, %v106
    %v1229 = vpop.permute.xlu0 %1228
    %1231 = vset.pattern.permute.xlu0 10
    %1232 = vperm.xlu0 %1231, %v107
    %v1233 = vpop.permute.xlu0 %1232
    %1235 = vset.pattern.permute.xlu0 10
    %1236 = vperm.xlu0 %1235, %v108
    %v1237 = vpop.permute.xlu0 %1236
    %1239 = vset.pattern.permute.xlu0 10
    %1240 = vperm.xlu0 %1239, %v109
    %v1241 = vpop.permute.xlu0 %1240
    %1243 = vset.pattern.permute.xlu0 10
    %1244 = vperm.xlu0 %1243, %v110
    %v1245 = vpop.permute.xlu0 %1244
    %1247 = vset.pattern.permute.xlu0 10
    %1248 = vperm.xlu0 %1247, %v111
    %v1249 = vpop.permute.xlu0 %1248
    %v1251 = vmul.f32 %v1189, %v80
    %v1252 = vmul.f32 %v1193, %v81
    %v1253 = vmul.f32 %v1197, %v82
    %v1254 = vmul.f32 %v1201, %v83
    %v1255 = vmul.f32 %v1205, %v84
    %v1256 = vmul.f32 %v1209, %v85
    %v1257 = vmul.f32 %v1213, %v86
    %v1258 = vmul.f32 %v1217, %v87
    %v1259 = vmul.f32 %v1221, %v88
    %v1260 = vmul.f32 %v1225, %v89
    %v1261 = vmul.f32 %v1229, %v90
    %v1262 = vmul.f32 %v1233, %v91
    %v1263 = vmul.f32 %v1237, %v92
    %v1264 = vmul.f32 %v1241, %v93
    %v1265 = vmul.f32 %v1245, %v94
    %v1266 = vmul.f32 %v1249, %v95
    %v1267 = vadd.f32 %v1171, %v1251
    %v1268 = vadd.f32 %v1172, %v1252
    %v1269 = vadd.f32 %v1173, %v1253
    %v1270 = vadd.f32 %v1174, %v1254
    %v1271 = vadd.f32 %v1175, %v1255
    %v1272 = vadd.f32 %v1176, %v1256
    %v1273 = vadd.f32 %v1177, %v1257
    %v1274 = vadd.f32 %v1178, %v1258
    %v1275 = vadd.f32 %v1179, %v1259
    %v1276 = vadd.f32 %v1180, %v1260
    %v1277 = vadd.f32 %v1181, %v1261
    %v1278 = vadd.f32 %v1182, %v1262
    %v1279 = vadd.f32 %v1183, %v1263
    %v1280 = vadd.f32 %v1184, %v1264
    %v1281 = vadd.f32 %v1185, %v1265
    %v1282 = vadd.f32 %v1186, %v1266
    %1283 = vset.pattern.permute.xlu0 11
    %1284 = vperm.xlu0 %1283, %v96
    %v1285 = vpop.permute.xlu0 %1284
    %1287 = vset.pattern.permute.xlu0 11
    %1288 = vperm.xlu0 %1287, %v97
    %v1289 = vpop.permute.xlu0 %1288
    %1291 = vset.pattern.permute.xlu0 11
    %1292 = vperm.xlu0 %1291, %v98
    %v1293 = vpop.permute.xlu0 %1292
    %1295 = vset.pattern.permute.xlu0 11
    %1296 = vperm.xlu0 %1295, %v99
    %v1297 = vpop.permute.xlu0 %1296
    %1299 = vset.pattern.permute.xlu0 11
    %1300 = vperm.xlu0 %1299, %v100
    %v1301 = vpop.permute.xlu0 %1300
    %1303 = vset.pattern.permute.xlu0 11
    %1304 = vperm.xlu0 %1303, %v101
    %v1305 = vpop.permute.xlu0 %1304
    %1307 = vset.pattern.permute.xlu0 11
    %1308 = vperm.xlu0 %1307, %v102
    %v1309 = vpop.permute.xlu0 %1308
    %1311 = vset.pattern.permute.xlu0 11
    %1312 = vperm.xlu0 %1311, %v103
    %v1313 = vpop.permute.xlu0 %1312
    %1315 = vset.pattern.permute.xlu0 11
    %1316 = vperm.xlu0 %1315, %v104
    %v1317 = vpop.permute.xlu0 %1316
    %1319 = vset.pattern.permute.xlu0 11
    %1320 = vperm.xlu0 %1319, %v105
    %v1321 = vpop.permute.xlu0 %1320
    %1323 = vset.pattern.permute.xlu0 11
    %1324 = vperm.xlu0 %1323, %v106
    %v1325 = vpop.permute.xlu0 %1324
    %1327 = vset.pattern.permute.xlu0 11
    %1328 = vperm.xlu0 %1327, %v107
    %v1329 = vpop.permute.xlu0 %1328
    %1331 = vset.pattern.permute.xlu0 11
    %1332 = vperm.xlu0 %1331, %v108
    %v1333 = vpop.permute.xlu0 %1332
    %1335 = vset.pattern.permute.xlu0 11
    %1336 = vperm.xlu0 %1335, %v109
    %v1337 = vpop.permute.xlu0 %1336
    %1339 = vset.pattern.permute.xlu0 11
    %1340 = vperm.xlu0 %1339, %v110
    %v1341 = vpop.permute.xlu0 %1340
    %1343 = vset.pattern.permute.xlu0 11
    %1344 = vperm.xlu0 %1343, %v111
    %v1345 = vpop.permute.xlu0 %1344
    %v1347 = vadd.f32 %v1267, %v1285
    %v1348 = vadd.f32 %v1268, %v1289
    %v1349 = vadd.f32 %v1269, %v1293
    %v1350 = vadd.f32 %v1270, %v1297
    %v1351 = vadd.f32 %v1271, %v1301
    %v1352 = vadd.f32 %v1272, %v1305
    %v1353 = vadd.f32 %v1273, %v1309
    %v1354 = vadd.f32 %v1274, %v1313
    %v1355 = vadd.f32 %v1275, %v1317
    %v1356 = vadd.f32 %v1276, %v1321
    %v1357 = vadd.f32 %v1277, %v1325
    %v1358 = vadd.f32 %v1278, %v1329
    %v1359 = vadd.f32 %v1279, %v1333
    %v1360 = vadd.f32 %v1280, %v1337
    %v1361 = vadd.f32 %v1281, %v1341
    %v1362 = vadd.f32 %v1282, %v1345
    %v1363 = vmax.f32 %v1347, 0.0
    %v1364 = vmax.f32 %v1348, 0.0
    %v1365 = vmax.f32 %v1349, 0.0
    %v1366 = vmax.f32 %v1350, 0.0
    %v1367 = vmax.f32 %v1351, 0.0
    %v1368 = vmax.f32 %v1352, 0.0
    %v1369 = vmax.f32 %v1353, 0.0
    %v1370 = vmax.f32 %v1354, 0.0
    %v1371 = vmax.f32 %v1355, 0.0
    %v1372 = vmax.f32 %v1356, 0.0
    %v1373 = vmax.f32 %v1357, 0.0
    %v1374 = vmax.f32 %v1358, 0.0
    %v1375 = vmax.f32 %v1359, 0.0
    %v1376 = vmax.f32 %v1360, 0.0
    %v1377 = vmax.f32 %v1361, 0.0
    %v1378 = vmax.f32 %v1362, 0.0
    %s1379 = scalar_lea.vmem %s3, 32
    %v1380 = vld [vmem:[%s1379] sm:$0xf]
    %v1381 = vld [vmem:[%s1379 + $0x4] sm:$0xf]
    %v1382 = vld [vmem:[%s1379 + $0x8] sm:$0xf]
    %v1383 = vld [vmem:[%s1379 + $0xc] sm:$0xf]
    %v1384 = vpack.c.bf16 %v1364, %v1363
    %v1385 = vpack.c.bf16 %v1366, %v1365
    %v1386 = vpack.c.bf16 %v1368, %v1367
    %v1387 = vpack.c.bf16 %v1370, %v1369
    %v1388 = vpack.c.bf16 %v1372, %v1371
    %v1389 = vpack.c.bf16 %v1374, %v1373
    %v1390 = vpack.c.bf16 %v1376, %v1375
    %v1391 = vpack.c.bf16 %v1378, %v1377
    %v1396 = vunpack.c.l.b16 %v1380
    %v1397 = vunpack.c.l.b16 %v1381
    %v1398 = vunpack.c.l.b16 %v1382
    %v1399 = vunpack.c.l.b16 %v1383
    %v1400 = vpack.c.b16 %v1397, %v1396
    %v1401 = vpack.c.b16 %v1399, %v1398
    %1404 = vmatprep.subr.bf16.mxu0 0
    %1405 = vmatpush1.bf16.msra.mxu0 %v1384
    %1406 = vmatprep.subr.bf16.mxu0 0
    %1407 = vmatpush1.bf16.msra.mxu0 %v1385
    %1408 = vmatprep.subr.bf16.mxu0 0
    %1409 = vmatpush1.bf16.msra.mxu0 %v1386
    %1410 = vmatprep.subr.bf16.mxu0 0
    %1411 = vmatpush1.bf16.msra.mxu0 %v1387
    %1412 = vmatprep.subr.bf16.mxu0 0
    %1413 = vmatpush1.bf16.msra.mxu0 %v1388
    %1414 = vmatprep.subr.bf16.mxu0 0
    %1415 = vmatpush1.bf16.msra.mxu0 %v1389
    %1416 = vmatprep.subr.bf16.mxu0 0
    %1417 = vmatpush1.bf16.msra.mxu0 %v1390
    %1418 = vmatprep.subr.bf16.mxu0 0
    %1419 = vmatpush1.bf16.msra.mxu0 %v1391
    %1420 = vmatprep.subr.bf16.mxu0 0
    %1421 = vmatpush1.bf16.msra.mxu0 0
    %1422 = vmatprep.subr.bf16.mxu0 0
    %1423 = vmatpush1.bf16.msra.mxu0 0
    %1424 = vmatprep.subr.bf16.mxu0 0
    %1425 = vmatpush1.bf16.msra.mxu0 0
    %1426 = vmatprep.subr.bf16.mxu0 0
    %1427 = vmatpush1.bf16.msra.mxu0 0
    %1428 = vmatprep.subr.bf16.mxu0 0
    %1429 = vmatpush1.bf16.msra.mxu0 0
    %1430 = vmatprep.subr.bf16.mxu0 0
    %1431 = vmatpush1.bf16.msra.mxu0 0
    %1432 = vmatprep.subr.bf16.mxu0 0
    %1433 = vmatpush1.bf16.msra.mxu0 0
    %1434 = vmatprep.subr.bf16.mxu0 0
    %1435 = vmatpush1.bf16.msra.mxu0 0
    %1436 = vmatprep.mubr.bf16.mxu0 0
    %1437 = vmatmul.mubr.bf16.gmra.mrb[0].mxu0 %v1400
    %v1438 = vpop.f32.mrb[0].mxu0
    %v1439 = vadd.f32 0.0, %v1438
    %v1440 = vpop.f32.mrb[0].mxu0
    %v1441 = vpop.f32.mrb[0].mxu0
    %v1442 = vadd.f32 0.0, %v1441
    %v1443 = vpop.f32.mrb[0].mxu0
    %1444 = vmatprep.mubr.bf16.mxu0 0
    %1445 = vmatmul.mubr.bf16.gmra.mrb[0].mxu0 %v1401
    %v1446 = vpop.f32.mrb[0].mxu0
    %v1447 = vadd.f32 0.0, %v1446
    %v1448 = vpop.f32.mrb[0].mxu0
    %v1449 = vpop.f32.mrb[0].mxu0
    %v1450 = vadd.f32 0.0, %v1449
    %v1451 = vpop.f32.mrb[0].mxu0
    %1452 = vdwg.mxu0
    %v1453 = vadd.f32 %v997, %v1439
    %v1454 = vadd.f32 %v1000, %v1442
    %v1455 = vadd.f32 %v1005, %v1447
    %v1456 = vadd.f32 %v1008, %v1450
    %1457 = vset.pattern.permute.xlu0 12
    %1458 = vperm.xlu0 %1457, %v96
    %v1459 = vpop.permute.xlu0 %1458
    %1461 = vset.pattern.permute.xlu0 12
    %1462 = vperm.xlu0 %1461, %v97
    %v1463 = vpop.permute.xlu0 %1462
    %1465 = vset.pattern.permute.xlu0 12
    %1466 = vperm.xlu0 %1465, %v98
    %v1467 = vpop.permute.xlu0 %1466
    %1469 = vset.pattern.permute.xlu0 12
    %1470 = vperm.xlu0 %1469, %v99
    %v1471 = vpop.permute.xlu0 %1470
    %1473 = vset.pattern.permute.xlu0 12
    %1474 = vperm.xlu0 %1473, %v100
    %v1475 = vpop.permute.xlu0 %1474
    %1477 = vset.pattern.permute.xlu0 12
    %1478 = vperm.xlu0 %1477, %v101
    %v1479 = vpop.permute.xlu0 %1478
    %1481 = vset.pattern.permute.xlu0 12
    %1482 = vperm.xlu0 %1481, %v102
    %v1483 = vpop.permute.xlu0 %1482
    %1485 = vset.pattern.permute.xlu0 12
    %1486 = vperm.xlu0 %1485, %v103
    %v1487 = vpop.permute.xlu0 %1486
    %1489 = vset.pattern.permute.xlu0 12
    %1490 = vperm.xlu0 %1489, %v104
    %v1491 = vpop.permute.xlu0 %1490
    %1493 = vset.pattern.permute.xlu0 12
    %1494 = vperm.xlu0 %1493, %v105
    %v1495 = vpop.permute.xlu0 %1494
    %1497 = vset.pattern.permute.xlu0 12
    %1498 = vperm.xlu0 %1497, %v106
    %v1499 = vpop.permute.xlu0 %1498
    %1501 = vset.pattern.permute.xlu0 12
    %1502 = vperm.xlu0 %1501, %v107
    %v1503 = vpop.permute.xlu0 %1502
    %1505 = vset.pattern.permute.xlu0 12
    %1506 = vperm.xlu0 %1505, %v108
    %v1507 = vpop.permute.xlu0 %1506
    %1509 = vset.pattern.permute.xlu0 12
    %1510 = vperm.xlu0 %1509, %v109
    %v1511 = vpop.permute.xlu0 %1510
    %1513 = vset.pattern.permute.xlu0 12
    %1514 = vperm.xlu0 %1513, %v110
    %v1515 = vpop.permute.xlu0 %1514
    %1517 = vset.pattern.permute.xlu0 12
    %1518 = vperm.xlu0 %1517, %v111
    %v1519 = vpop.permute.xlu0 %1518
    %v1521 = vmul.f32 %v1459, %v46
    %v1522 = vmul.f32 %v1463, %v47
    %v1523 = vmul.f32 %v1467, %v48
    %v1524 = vmul.f32 %v1471, %v49
    %v1525 = vmul.f32 %v1475, %v50
    %v1526 = vmul.f32 %v1479, %v51
    %v1527 = vmul.f32 %v1483, %v52
    %v1528 = vmul.f32 %v1487, %v53
    %v1529 = vmul.f32 %v1491, %v54
    %v1530 = vmul.f32 %v1495, %v55
    %v1531 = vmul.f32 %v1499, %v56
    %v1532 = vmul.f32 %v1503, %v57
    %v1533 = vmul.f32 %v1507, %v58
    %v1534 = vmul.f32 %v1511, %v59
    %v1535 = vmul.f32 %v1515, %v60
    %v1536 = vmul.f32 %v1519, %v61
    %1537 = vset.pattern.permute.xlu0 13
    %1538 = vperm.xlu0 %1537, %v96
    %v1539 = vpop.permute.xlu0 %1538
    %1541 = vset.pattern.permute.xlu0 13
    %1542 = vperm.xlu0 %1541, %v97
    %v1543 = vpop.permute.xlu0 %1542
    %1545 = vset.pattern.permute.xlu0 13
    %1546 = vperm.xlu0 %1545, %v98
    %v1547 = vpop.permute.xlu0 %1546
    %1549 = vset.pattern.permute.xlu0 13
    %1550 = vperm.xlu0 %1549, %v99
    %v1551 = vpop.permute.xlu0 %1550
    %1553 = vset.pattern.permute.xlu0 13
    %1554 = vperm.xlu0 %1553, %v100
    %v1555 = vpop.permute.xlu0 %1554
    %1557 = vset.pattern.permute.xlu0 13
    %1558 = vperm.xlu0 %1557, %v101
    %v1559 = vpop.permute.xlu0 %1558
    %1561 = vset.pattern.permute.xlu0 13
    %1562 = vperm.xlu0 %1561, %v102
    %v1563 = vpop.permute.xlu0 %1562
    %1565 = vset.pattern.permute.xlu0 13
    %1566 = vperm.xlu0 %1565, %v103
    %v1567 = vpop.permute.xlu0 %1566
    %1569 = vset.pattern.permute.xlu0 13
    %1570 = vperm.xlu0 %1569, %v104
    %v1571 = vpop.permute.xlu0 %1570
    %1573 = vset.pattern.permute.xlu0 13
    %1574 = vperm.xlu0 %1573, %v105
    %v1575 = vpop.permute.xlu0 %1574
    %1577 = vset.pattern.permute.xlu0 13
    %1578 = vperm.xlu0 %1577, %v106
    %v1579 = vpop.permute.xlu0 %1578
    %1581 = vset.pattern.permute.xlu0 13
    %1582 = vperm.xlu0 %1581, %v107
    %v1583 = vpop.permute.xlu0 %1582
    %1585 = vset.pattern.permute.xlu0 13
    %1586 = vperm.xlu0 %1585, %v108
    %v1587 = vpop.permute.xlu0 %1586
    %1589 = vset.pattern.permute.xlu0 13
    %1590 = vperm.xlu0 %1589, %v109
    %v1591 = vpop.permute.xlu0 %1590
    %1593 = vset.pattern.permute.xlu0 13
    %1594 = vperm.xlu0 %1593, %v110
    %v1595 = vpop.permute.xlu0 %1594
    %1597 = vset.pattern.permute.xlu0 13
    %1598 = vperm.xlu0 %1597, %v111
    %v1599 = vpop.permute.xlu0 %1598
    %v1601 = vmul.f32 %v1539, %v63
    %v1602 = vmul.f32 %v1543, %v64
    %v1603 = vmul.f32 %v1547, %v65
    %v1604 = vmul.f32 %v1551, %v66
    %v1605 = vmul.f32 %v1555, %v67
    %v1606 = vmul.f32 %v1559, %v68
    %v1607 = vmul.f32 %v1563, %v69
    %v1608 = vmul.f32 %v1567, %v70
    %v1609 = vmul.f32 %v1571, %v71
    %v1610 = vmul.f32 %v1575, %v72
    %v1611 = vmul.f32 %v1579, %v73
    %v1612 = vmul.f32 %v1583, %v74
    %v1613 = vmul.f32 %v1587, %v75
    %v1614 = vmul.f32 %v1591, %v76
    %v1615 = vmul.f32 %v1595, %v77
    %v1616 = vmul.f32 %v1599, %v78
    %v1617 = vadd.f32 %v1521, %v1601
    %v1618 = vadd.f32 %v1522, %v1602
    %v1619 = vadd.f32 %v1523, %v1603
    %v1620 = vadd.f32 %v1524, %v1604
    %v1621 = vadd.f32 %v1525, %v1605
    %v1622 = vadd.f32 %v1526, %v1606
    %v1623 = vadd.f32 %v1527, %v1607
    %v1624 = vadd.f32 %v1528, %v1608
    %v1625 = vadd.f32 %v1529, %v1609
    %v1626 = vadd.f32 %v1530, %v1610
    %v1627 = vadd.f32 %v1531, %v1611
    %v1628 = vadd.f32 %v1532, %v1612
    %v1629 = vadd.f32 %v1533, %v1613
    %v1630 = vadd.f32 %v1534, %v1614
    %v1631 = vadd.f32 %v1535, %v1615
    %v1632 = vadd.f32 %v1536, %v1616
    %1633 = vset.pattern.permute.xlu0 14
    %1634 = vperm.xlu0 %1633, %v96
    %v1635 = vpop.permute.xlu0 %1634
    %1637 = vset.pattern.permute.xlu0 14
    %1638 = vperm.xlu0 %1637, %v97
    %v1639 = vpop.permute.xlu0 %1638
    %1641 = vset.pattern.permute.xlu0 14
    %1642 = vperm.xlu0 %1641, %v98
    %v1643 = vpop.permute.xlu0 %1642
    %1645 = vset.pattern.permute.xlu0 14
    %1646 = vperm.xlu0 %1645, %v99
    %v1647 = vpop.permute.xlu0 %1646
    %1649 = vset.pattern.permute.xlu0 14
    %1650 = vperm.xlu0 %1649, %v100
    %v1651 = vpop.permute.xlu0 %1650
    %1653 = vset.pattern.permute.xlu0 14
    %1654 = vperm.xlu0 %1653, %v101
    %v1655 = vpop.permute.xlu0 %1654
    %1657 = vset.pattern.permute.xlu0 14
    %1658 = vperm.xlu0 %1657, %v102
    %v1659 = vpop.permute.xlu0 %1658
    %1661 = vset.pattern.permute.xlu0 14
    %1662 = vperm.xlu0 %1661, %v103
    %v1663 = vpop.permute.xlu0 %1662
    %1665 = vset.pattern.permute.xlu0 14
    %1666 = vperm.xlu0 %1665, %v104
    %v1667 = vpop.permute.xlu0 %1666
    %1669 = vset.pattern.permute.xlu0 14
    %1670 = vperm.xlu0 %1669, %v105
    %v1671 = vpop.permute.xlu0 %1670
    %1673 = vset.pattern.permute.xlu0 14
    %1674 = vperm.xlu0 %1673, %v106
    %v1675 = vpop.permute.xlu0 %1674
    %1677 = vset.pattern.permute.xlu0 14
    %1678 = vperm.xlu0 %1677, %v107
    %v1679 = vpop.permute.xlu0 %1678
    %1681 = vset.pattern.permute.xlu0 14
    %1682 = vperm.xlu0 %1681, %v108
    %v1683 = vpop.permute.xlu0 %1682
    %1685 = vset.pattern.permute.xlu0 14
    %1686 = vperm.xlu0 %1685, %v109
    %v1687 = vpop.permute.xlu0 %1686
    %1689 = vset.pattern.permute.xlu0 14
    %1690 = vperm.xlu0 %1689, %v110
    %v1691 = vpop.permute.xlu0 %1690
    %1693 = vset.pattern.permute.xlu0 14
    %1694 = vperm.xlu0 %1693, %v111
    %v1695 = vpop.permute.xlu0 %1694
    %v1697 = vmul.f32 %v1635, %v80
    %v1698 = vmul.f32 %v1639, %v81
    %v1699 = vmul.f32 %v1643, %v82
    %v1700 = vmul.f32 %v1647, %v83
    %v1701 = vmul.f32 %v1651, %v84
    %v1702 = vmul.f32 %v1655, %v85
    %v1703 = vmul.f32 %v1659, %v86
    %v1704 = vmul.f32 %v1663, %v87
    %v1705 = vmul.f32 %v1667, %v88
    %v1706 = vmul.f32 %v1671, %v89
    %v1707 = vmul.f32 %v1675, %v90
    %v1708 = vmul.f32 %v1679, %v91
    %v1709 = vmul.f32 %v1683, %v92
    %v1710 = vmul.f32 %v1687, %v93
    %v1711 = vmul.f32 %v1691, %v94
    %v1712 = vmul.f32 %v1695, %v95
    %v1713 = vadd.f32 %v1617, %v1697
    %v1714 = vadd.f32 %v1618, %v1698
    %v1715 = vadd.f32 %v1619, %v1699
    %v1716 = vadd.f32 %v1620, %v1700
    %v1717 = vadd.f32 %v1621, %v1701
    %v1718 = vadd.f32 %v1622, %v1702
    %v1719 = vadd.f32 %v1623, %v1703
    %v1720 = vadd.f32 %v1624, %v1704
    %v1721 = vadd.f32 %v1625, %v1705
    %v1722 = vadd.f32 %v1626, %v1706
    %v1723 = vadd.f32 %v1627, %v1707
    %v1724 = vadd.f32 %v1628, %v1708
    %v1725 = vadd.f32 %v1629, %v1709
    %v1726 = vadd.f32 %v1630, %v1710
    %v1727 = vadd.f32 %v1631, %v1711
    %v1728 = vadd.f32 %v1632, %v1712
    %1729 = vset.pattern.permute.xlu0 15
    %1730 = vperm.xlu0 %1729, %v96
    %v1731 = vpop.permute.xlu0 %1730
    %1733 = vset.pattern.permute.xlu0 15
    %1734 = vperm.xlu0 %1733, %v97
    %v1735 = vpop.permute.xlu0 %1734
    %1737 = vset.pattern.permute.xlu0 15
    %1738 = vperm.xlu0 %1737, %v98
    %v1739 = vpop.permute.xlu0 %1738
    %1741 = vset.pattern.permute.xlu0 15
    %1742 = vperm.xlu0 %1741, %v99
    %v1743 = vpop.permute.xlu0 %1742
    %1745 = vset.pattern.permute.xlu0 15
    %1746 = vperm.xlu0 %1745, %v100
    %v1747 = vpop.permute.xlu0 %1746
    %1749 = vset.pattern.permute.xlu0 15
    %1750 = vperm.xlu0 %1749, %v101
    %v1751 = vpop.permute.xlu0 %1750
    %1753 = vset.pattern.permute.xlu0 15
    %1754 = vperm.xlu0 %1753, %v102
    %v1755 = vpop.permute.xlu0 %1754
    %1757 = vset.pattern.permute.xlu0 15
    %1758 = vperm.xlu0 %1757, %v103
    %v1759 = vpop.permute.xlu0 %1758
    %1761 = vset.pattern.permute.xlu0 15
    %1762 = vperm.xlu0 %1761, %v104
    %v1763 = vpop.permute.xlu0 %1762
    %1765 = vset.pattern.permute.xlu0 15
    %1766 = vperm.xlu0 %1765, %v105
    %v1767 = vpop.permute.xlu0 %1766
    %1769 = vset.pattern.permute.xlu0 15
    %1770 = vperm.xlu0 %1769, %v106
    %v1771 = vpop.permute.xlu0 %1770
    %1773 = vset.pattern.permute.xlu0 15
    %1774 = vperm.xlu0 %1773, %v107
    %v1775 = vpop.permute.xlu0 %1774
    %1777 = vset.pattern.permute.xlu0 15
    %1778 = vperm.xlu0 %1777, %v108
    %v1779 = vpop.permute.xlu0 %1778
    %1781 = vset.pattern.permute.xlu0 15
    %1782 = vperm.xlu0 %1781, %v109
    %v1783 = vpop.permute.xlu0 %1782
    %1785 = vset.pattern.permute.xlu0 15
    %1786 = vperm.xlu0 %1785, %v110
    %v1787 = vpop.permute.xlu0 %1786
    %1789 = vset.pattern.permute.xlu0 15
    %1790 = vperm.xlu0 %1789, %v111
    %v1791 = vpop.permute.xlu0 %1790
    %v1793 = vadd.f32 %v1713, %v1731
    %v1794 = vadd.f32 %v1714, %v1735
    %v1795 = vadd.f32 %v1715, %v1739
    %v1796 = vadd.f32 %v1716, %v1743
    %v1797 = vadd.f32 %v1717, %v1747
    %v1798 = vadd.f32 %v1718, %v1751
    %v1799 = vadd.f32 %v1719, %v1755
    %v1800 = vadd.f32 %v1720, %v1759
    %v1801 = vadd.f32 %v1721, %v1763
    %v1802 = vadd.f32 %v1722, %v1767
    %v1803 = vadd.f32 %v1723, %v1771
    %v1804 = vadd.f32 %v1724, %v1775
    %v1805 = vadd.f32 %v1725, %v1779
    %v1806 = vadd.f32 %v1726, %v1783
    %v1807 = vadd.f32 %v1727, %v1787
    %v1808 = vadd.f32 %v1728, %v1791
    %v1809 = vmax.f32 %v1793, 0.0
    %v1810 = vmax.f32 %v1794, 0.0
    %v1811 = vmax.f32 %v1795, 0.0
    %v1812 = vmax.f32 %v1796, 0.0
    %v1813 = vmax.f32 %v1797, 0.0
    %v1814 = vmax.f32 %v1798, 0.0
    %v1815 = vmax.f32 %v1799, 0.0
    %v1816 = vmax.f32 %v1800, 0.0
    %v1817 = vmax.f32 %v1801, 0.0
    %v1818 = vmax.f32 %v1802, 0.0
    %v1819 = vmax.f32 %v1803, 0.0
    %v1820 = vmax.f32 %v1804, 0.0
    %v1821 = vmax.f32 %v1805, 0.0
    %v1822 = vmax.f32 %v1806, 0.0
    %v1823 = vmax.f32 %v1807, 0.0
    %v1824 = vmax.f32 %v1808, 0.0
    %s1825 = scalar_lea.vmem %s3, 48
    %v1826 = vld [vmem:[%s1825] sm:$0xf]
    %v1827 = vld [vmem:[%s1825 + $0x4] sm:$0xf]
    %v1828 = vld [vmem:[%s1825 + $0x8] sm:$0xf]
    %v1829 = vld [vmem:[%s1825 + $0xc] sm:$0xf]
    %v1830 = vpack.c.bf16 %v1810, %v1809
    %v1831 = vpack.c.bf16 %v1812, %v1811
    %v1832 = vpack.c.bf16 %v1814, %v1813
    %v1833 = vpack.c.bf16 %v1816, %v1815
    %v1834 = vpack.c.bf16 %v1818, %v1817
    %v1835 = vpack.c.bf16 %v1820, %v1819
    %v1836 = vpack.c.bf16 %v1822, %v1821
    %v1837 = vpack.c.bf16 %v1824, %v1823
    %v1842 = vunpack.c.l.b16 %v1826
    %v1843 = vunpack.c.l.b16 %v1827
    %v1844 = vunpack.c.l.b16 %v1828
    %v1845 = vunpack.c.l.b16 %v1829
    %v1846 = vpack.c.b16 %v1843, %v1842
    %v1847 = vpack.c.b16 %v1845, %v1844
    %1850 = vmatprep.subr.bf16.mxu0 0
    %1851 = vmatpush1.bf16.msra.mxu0 %v1830
    %1852 = vmatprep.subr.bf16.mxu0 0
    %1853 = vmatpush1.bf16.msra.mxu0 %v1831
    %1854 = vmatprep.subr.bf16.mxu0 0
    %1855 = vmatpush1.bf16.msra.mxu0 %v1832
    %1856 = vmatprep.subr.bf16.mxu0 0
    %1857 = vmatpush1.bf16.msra.mxu0 %v1833
    %1858 = vmatprep.subr.bf16.mxu0 0
    %1859 = vmatpush1.bf16.msra.mxu0 %v1834
    %1860 = vmatprep.subr.bf16.mxu0 0
    %1861 = vmatpush1.bf16.msra.mxu0 %v1835
    %1862 = vmatprep.subr.bf16.mxu0 0
    %1863 = vmatpush1.bf16.msra.mxu0 %v1836
    %1864 = vmatprep.subr.bf16.mxu0 0
    %1865 = vmatpush1.bf16.msra.mxu0 %v1837
    %1866 = vmatprep.subr.bf16.mxu0 0
    %1867 = vmatpush1.bf16.msra.mxu0 0
    %1868 = vmatprep.subr.bf16.mxu0 0
    %1869 = vmatpush1.bf16.msra.mxu0 0
    %1870 = vmatprep.subr.bf16.mxu0 0
    %1871 = vmatpush1.bf16.msra.mxu0 0
    %1872 = vmatprep.subr.bf16.mxu0 0
    %1873 = vmatpush1.bf16.msra.mxu0 0
    %1874 = vmatprep.subr.bf16.mxu0 0
    %1875 = vmatpush1.bf16.msra.mxu0 0
    %1876 = vmatprep.subr.bf16.mxu0 0
    %1877 = vmatpush1.bf16.msra.mxu0 0
    %1878 = vmatprep.subr.bf16.mxu0 0
    %1879 = vmatpush1.bf16.msra.mxu0 0
    %1880 = vmatprep.subr.bf16.mxu0 0
    %1881 = vmatpush1.bf16.msra.mxu0 0
    %1882 = vmatprep.mubr.bf16.mxu0 0
    %1883 = vmatmul.mubr.bf16.gmra.mrb[0].mxu0 %v1846
    %v1884 = vpop.f32.mrb[0].mxu0
    %v1885 = vadd.f32 0.0, %v1884
    %v1886 = vpop.f32.mrb[0].mxu0
    %v1887 = vpop.f32.mrb[0].mxu0
    %v1888 = vadd.f32 0.0, %v1887
    %v1889 = vpop.f32.mrb[0].mxu0
    %1890 = vmatprep.mubr.bf16.mxu0 0
    %1891 = vmatmul.mubr.bf16.gmra.mrb[0].mxu0 %v1847
    %v1892 = vpop.f32.mrb[0].mxu0
    %v1893 = vadd.f32 0.0, %v1892
    %v1894 = vpop.f32.mrb[0].mxu0
    %v1895 = vpop.f32.mrb[0].mxu0
    %v1896 = vadd.f32 0.0, %v1895
    %v1897 = vpop.f32.mrb[0].mxu0
    %1898 = vdwg.mxu0
    %v1899 = vadd.f32 %v1453, %v1885
    %v1900 = vadd.f32 %v1454, %v1888
    %v1901 = vadd.f32 %v1455, %v1893
    %v1902 = vadd.f32 %v1456, %v1896
    %v1903 = vld [vmem:[%s4] sm:$0xff]
    %v1904 = vld [vmem:[%s4 + $0x8] sm:$0xff]
    %v1905 = vld [vmem:[%s4 + $0x10] sm:$0xff]
    %v1906 = vld [vmem:[%s4 + $0x18] sm:$0xff]
    %1908 = vset.pattern.permute.xlu0 0
    %1909 = vperm.xlu0 %1908, %v1903
    %v1910 = vpop.permute.xlu0 %1909
    %1913 = vset.pattern.permute.xlu0 0
    %1914 = vperm.xlu0 %1913, %v1904
    %v1915 = vpop.permute.xlu0 %1914
    %1918 = vset.pattern.permute.xlu0 0
    %1919 = vperm.xlu0 %1918, %v1905
    %v1920 = vpop.permute.xlu0 %1919
    %1923 = vset.pattern.permute.xlu0 0
    %1924 = vperm.xlu0 %1923, %v1906
    %v1925 = vpop.permute.xlu0 %1924
    %v1927 = vadd.f32 %v1899, %v1910
    %v1928 = vadd.f32 %v1900, %v1915
    %v1929 = vadd.f32 %v1901, %v1920
    %v1930 = vadd.f32 %v1902, %v1925
    %v1931 = vmax.f32 %v1927, 0.0
    %v1932 = vmax.f32 %v1928, 0.0
    %v1933 = vmax.f32 %v1929, 0.0
    %v1934 = vmax.f32 %v1930, 0.0
    %v1935 = vld [vmem:[%s5] sm:$0xff]
    %v1936 = vld [vmem:[%s5 + $0x8] sm:$0xff]
    %v1937 = vld [vmem:[%s6] sm:$0xff]
    %v1938 = vld [vmem:[%s6 + $0x8] sm:$0xff]
    %1940 = vset.pattern.permute.xlu0 0
    %1941 = vperm.xlu0 %1940, %v1937
    %v1942 = vpop.permute.xlu0 %1941
    %1945 = vset.pattern.permute.xlu0 0
    %1946 = vperm.xlu0 %1945, %v1938
    %v1947 = vpop.permute.xlu0 %1946
    %vm1949 = vcmask 261120
    %v1951 = vsel %vm1949, %v1935, 0
    %v1954 = vsel %vm1949, %v1936, 0
    %1956 = vmatprep.subr.mxu0 0.0
    %1957 = vmatpush1.msra.mxu0 %v1931
    %1958 = vmatprep.subr.mxu0 0.0
    %1959 = vmatpush1.msra.mxu0 %v1932
    %1960 = vmatprep.subr.mxu0 0.0
    %1961 = vmatpush1.msra.mxu0 %v1933
    %1962 = vmatprep.subr.mxu0 0.0
    %1963 = vmatpush1.msra.mxu0 %v1934
    %1964 = vmatprep.subr.mxu0 0.0
    %1965 = vmatpush1.msra.mxu0 0.0
    %1966 = vmatprep.subr.mxu0 0.0
    %1967 = vmatpush1.msra.mxu0 0.0
    %1968 = vmatprep.subr.mxu0 0.0
    %1969 = vmatpush1.msra.mxu0 0.0
    %1970 = vmatprep.subr.mxu0 0.0
    %1971 = vmatpush1.msra.mxu0 0.0
    %1972 = vmatprep.subr.mxu0 0.0
    %1973 = vmatpush1.msra.mxu0 0.0
    %1974 = vmatprep.subr.mxu0 0.0
    %1975 = vmatpush1.msra.mxu0 0.0
    %1976 = vmatprep.subr.mxu0 0.0
    %1977 = vmatpush1.msra.mxu0 0.0
    %1978 = vmatprep.subr.mxu0 0.0
    %1979 = vmatpush1.msra.mxu0 0.0
    %1980 = vmatprep.subr.mxu0 0.0
    %1981 = vmatpush1.msra.mxu0 0.0
    %1982 = vmatprep.subr.mxu0 0.0
    %1983 = vmatpush1.msra.mxu0 0.0
    %1984 = vmatprep.subr.mxu0 0.0
    %1985 = vmatpush1.msra.mxu0 0.0
    %1986 = vmatprep.subr.mxu0 0.0
    %1987 = vmatpush1.msra.mxu0 0.0
    %1988 = vmatprep.subr.mxu0 0.0
    %1989 = vmatpush1.msra.mxu0 0.0
    %1990 = vmatprep.subr.mxu0 0.0
    %1991 = vmatpush1.msra.mxu0 0.0
    %1992 = vmatprep.subr.mxu0 0.0
    %1993 = vmatpush1.msra.mxu0 0.0
    %1994 = vmatprep.subr.mxu0 0.0
    %1995 = vmatpush1.msra.mxu0 0.0
    %1996 = vmatprep.subr.mxu0 0.0
    %1997 = vmatpush1.msra.mxu0 0.0
    %1998 = vmatprep.subr.mxu0 0.0
    %1999 = vmatpush1.msra.mxu0 0.0
    %2000 = vmatprep.subr.mxu0 0.0
    %2001 = vmatpush1.msra.mxu0 0.0
    %2002 = vmatprep.subr.mxu0 0.0
    %2003 = vmatpush1.msra.mxu0 0.0
    %2004 = vmatprep.subr.mxu0 0.0
    %2005 = vmatpush1.msra.mxu0 0.0
    %2006 = vmatprep.subr.mxu0 0.0
    %2007 = vmatpush1.msra.mxu0 0.0
    %2008 = vmatprep.subr.mxu0 0.0
    %2009 = vmatpush1.msra.mxu0 0.0
    %2010 = vmatprep.subr.mxu0 0.0
    %2011 = vmatpush1.msra.mxu0 0.0
    %2012 = vmatprep.subr.mxu0 0.0
    %2013 = vmatpush1.msra.mxu0 0.0
    %2014 = vmatprep.subr.mxu0 0.0
    %2015 = vmatpush1.msra.mxu0 0.0
    %2016 = vmatprep.subr.mxu0 0.0
    %2017 = vmatpush1.msra.mxu0 0.0
    %2018 = vmatprep.subr.mxu0 0.0
    %2019 = vmatpush1.msra.mxu0 0.0
    %2020 = vmatprep.mubr.f32.mxu0 0.0
    %2021 = vmatmul.mubr.f32.gmra.mrb[0].mxu0 %v1951
    %v2022 = vpop.f32.mrb[0].mxu0
    %v2023 = vadd.f32 %v1942, %v2022
    %v2024 = vpop.f32.mrb[0].mxu0
    %2025 = vmatprep.mubr.f32.mxu0 0.0
    %2026 = vmatmul.mubr.f32.gmra.mrb[0].mxu0 %v1954
    %v2027 = vpop.f32.mrb[0].mxu0
    %v2028 = vadd.f32 %v1947, %v2027
    %v2029 = vpop.f32.mrb[0].mxu0
    %2030 = vdwg.mxu0
    %v2031 = vxor.u32 %v2023, 2147483648
    %v2032 = vxor.u32 %v2028, 2147483648
    %v2033 = vmul.f32 %v2031, 1.442695
    %v2034 = vpow.pop %v2033
    %v2035 = vmul.f32 %v2032, 1.442695
    %v2036 = vpow.pop %v2035
    %v2037 = vadd.f32 %v2034, 1.0
    %v2038 = vadd.f32 %v2036, 1.0
    %v2039 = vrcp.pop %v2037
    %v2040 = vmul.f32 1.0, %v2039
    %v2041 = vrcp.pop %v2038
    %v2042 = vmul.f32 1.0, %v2041
    %v2043 = vld [vmem:[%s7] sm:$0xff]
    %v2044 = vld [vmem:[%s7 + $0x8] sm:$0xff]
    %2046 = vset.pattern.permute.xlu0 0
    %2047 = vperm.xlu0 %2046, %v2043
    %v2048 = vpop.permute.xlu0 %2047
    %2051 = vset.pattern.permute.xlu0 0
    %2052 = vperm.xlu0 %2051, %v2044
    %v2053 = vpop.permute.xlu0 %2052
    %v2055 = vmul.f32 %v2040, %v2048
    %v2056 = vmul.f32 %v2042, %v2053
    %v2057 = vadd.f32 %v2055, %v2056
    %v2058 = vrot.slane %v2057, 4
    %v2059 = vadd.f32 %v2057, %v2058
    %v2060 = vrot.slane %v2059, 2
    %v2061 = vadd.f32 %v2059, %v2060
    %v2062 = vrot.slane %v2061, 1
    %v2063 = vadd.f32 %v2061, %v2062
    %s2064 = sld [smem:[#allocation2]]
    %v2065 = vstv %s2064
    %v2066 = vadd.f32 %v2063, %v2065
    %2067 = vst [vmem:[#allocation6] sm:$0xff] %v2066
    // Predicated region
    $region38: #{tpu_custom_call.1} parent=1 // pred_check
      _
    $region39: #{tpu_custom_call.1} parent=1 // pred_check_branch
      %2069 = sbr.rel (0) target = $region41
    $region40: #{tpu_custom_call.1} parent=1 // pred_region
      %s2071 = ssub.s32 128, 128
      %2072 = vsyncadd [#allocation5], %s2071
      %s2074 = sshll.u32 [#allocation6], 4
      %s2075 = int_to_ptr.vmem [resolvable:$true] %s2074
      %2077 = dma.vmem_to_hbm [thread:$0]  %s2075, 128, %s8, [#allocation5]
    $region41: #{tpu_custom_call.1} parent=1 // pred_fallthru
      _
    // Predicated region
    $region42: #{tpu_custom_call.1} parent=1 // pred_check
      _
    $region43: #{tpu_custom_call.1} parent=1 // pred_check_branch
      %2079 = sbr.rel (0) target = $region45
    $region44: #{tpu_custom_call.1} parent=1 // pred_region
      %2080 = dma.done [#allocation5], 128
    $region45: #{tpu_custom_call.1} parent=1 // pred_fallthru
      _
    %2081 = vsyncpa [#allocation4], 1
    %2082 = vsyncpa [#allocation5], 1

</llo_original>
